<compile_context>
chip_gen: v5e
topology: v5e:2x2
jax: 0.10.0
libtpu: 0.0.40
codegen_flags: <defaults>
</compile_context>

<pallas_src>
import jax
import jax.numpy as jnp
from jax.experimental import pallas as pl
from jax.experimental.pallas import tpu as pltpu

_LANE = 128       # pad action dim up to this for lane-dense MXU output / stores
_NEG_BIG = -1e30  # bias for padded action columns: vanishes under softmax


def _round_up(n, m):
    return ((n + m - 1) // m) * m


# ----------------------------- kernels --------------------------------------

def _mlp_logits(x_ref, w1_ref, b1_ref, w2_ref, b2_ref, w3_ref, b3_ref):
    # x streamed as raw f32; cast to bf16 in VMEM (no wrapper-side HBM pass).
    xb = x_ref[...].astype(jnp.bfloat16)
    # layer 1: Linear(S,H) + ReLU  (bf16 MXU, f32 accumulate)
    h = jnp.dot(xb, w1_ref[...], preferred_element_type=jnp.float32)
    h = jnp.maximum(h + b1_ref[...], 0.0).astype(jnp.bfloat16)
    # layer 2: Linear(H,H) + ReLU
    h = jnp.dot(h, w2_ref[...], preferred_element_type=jnp.float32)
    h = jnp.maximum(h + b2_ref[...], 0.0).astype(jnp.bfloat16)
    # layer 3: Linear(H,A_pad)
    logits = jnp.dot(h, w3_ref[...], preferred_element_type=jnp.float32)
    return logits + b3_ref[...]


def _softmax_store(logits, out_ref):
    m = jnp.max(logits, axis=-1, keepdims=True)
    e = jnp.exp(logits - m)
    denom = jnp.sum(e, axis=-1, keepdims=True)
    # Exact reciprocal (still EUP slot, free under DMA slack) -> rows sum to 1
    # at f32 precision for downstream PPO log-prob use.
    out_ref[...] = (e * pl.reciprocal(denom)).astype(out_ref.dtype)


def actor_kernel_masked(x_ref, w1_ref, b1_ref, w2_ref, b2_ref, w3_ref, b3_ref,
                        mask_ref, out_ref):
    logits = _mlp_logits(x_ref, w1_ref, b1_ref, w2_ref, b2_ref, w3_ref, b3_ref)
    # int8 0/1 mask -> f32 penalty, identical to the module's (mask-1)*1e9.
    m = mask_ref[...].astype(jnp.float32)
    logits = logits + (m - 1.0) * 1e9
    _softmax_store(logits, out_ref)


def actor_kernel_nomask(x_ref, w1_ref, b1_ref, w2_ref, b2_ref, w3_ref, b3_ref,
                        out_ref):
    logits = _mlp_logits(x_ref, w1_ref, b1_ref, w2_ref, b2_ref, w3_ref, b3_ref)
    _softmax_store(logits, out_ref)


# ----------------------------- params ---------------------------------------

def init_params(key, state_dim, hidden_dim, action_dim):
    """Deterministic PyTorch-Linear-style (uniform +-1/sqrt(fan_in)) init, f32."""
    ks = jax.random.split(key, 6)

    def lin(kw, kb, fan_in, fan_out):
        bound = 1.0 / jnp.sqrt(jnp.float32(fan_in))
        w = jax.random.uniform(kw, (fan_in, fan_out), jnp.float32, -bound, bound)
        b = jax.random.uniform(kb, (1, fan_out), jnp.float32, -bound, bound)
        return w, b

    w1, b1 = lin(ks[0], ks[1], state_dim, hidden_dim)
    w2, b2 = lin(ks[2], ks[3], hidden_dim, hidden_dim)
    w3, b3 = lin(ks[4], ks[5], hidden_dim, action_dim)
    return {"w1": w1, "b1": b1, "w2": w2, "b2": b2, "w3": w3, "b3": b3}


def prepare_params(params, *, pad_to=_LANE):
    """Cast weights to bf16 and pad the action dim to a lane-dense width.

    Padded w3 columns are 0 and padded b3 columns are -1e30, so padded logits
    underflow to 0 in the softmax regardless of the mask.  Done once, offline.
    """
    A = params["w3"].shape[1]
    A_pad = _round_up(A, pad_to)
    pad = A_pad - A
    w3 = jnp.pad(params["w3"], ((0, 0), (0, pad)))
    b3 = jnp.pad(params["b3"], ((0, 0), (0, pad)), constant_values=_NEG_BIG)
    return {
        "w1": params["w1"].astype(jnp.bfloat16),
        "b1": params["b1"].astype(jnp.float32),
        "w2": params["w2"].astype(jnp.bfloat16),
        "b2": params["b2"].astype(jnp.float32),
        "w3": w3.astype(jnp.bfloat16),
        "b3": b3.astype(jnp.float32),
        "action_dim": A,  # python int, used to slice the padded output
    }


# ----------------------------- wrapper ---------------------------------------

def actor_net_pallas(x, prep, mask=None, *, tile_b=512):
    """Fused ActorNet forward.

    x: (B, S) float32            prep: output of prepare_params
    mask: optional (B, A) 0/1 array (any real dtype; treated as binary)
    Returns (B, A) float32 action probabilities.
    """
    B, S = x.shape
    H = prep["w1"].shape[1]
    A_pad = prep["w3"].shape[1]
    A = prep["action_dim"]

    # Batch tile: big (amortize ~0.35us/step, approach HBM roofline) but
    # capped so the grid keeps >= 2 steps when B allows it, so the "parallel"
    # batch axis can shard across v7x's two TensorCores.  Multiple of 32
    # (covers int8 mask sublane packing); ragged last block handled by Pallas.
    cap = _round_up(max(pl.cdiv(B, 2), 1), 32)
    tile_b = _round_up(max(32, min(int(tile_b), cap)), 32)
    nb = pl.cdiv(B, tile_b)

    def resident(shape):
        # Weights/biases: same block every grid step -> stays VMEM-resident.
        return pl.BlockSpec(shape, lambda i: (0, 0))

    def batched(last):
        return pl.BlockSpec((tile_b, last), lambda i: (i, 0))

    in_specs = [
        batched(S),                                   # x (raw f32, cast in-kernel)
        resident((S, H)), resident((1, H)),           # w1, b1
        resident((H, H)), resident((1, H)),           # w2, b2
        resident((H, A_pad)), resident((1, A_pad)),   # w3, b3
    ]
    inputs = [x, prep["w1"], prep["b1"], prep["w2"], prep["b2"],
              prep["w3"], prep["b3"]]

    weight_bytes = 2 * (S * H + H * H + H * A_pad) + 4 * (2 * H + A_pad)
    bytes_accessed = x.dtype.itemsize * B * S + 4 * B * A_pad + weight_bytes

    if mask is not None:
        # Binary action mask -> int8, padded to the lane width (tiny vs x:
        # B*A reads, B*A_pad int8 writes; 4x less kernel DMA than f32).
        # TODO(synk): non-binary float masks would need the bf16/f32 path to
        # reproduce (mask-1)*1e9 for values other than 0/1.
        mask_i8 = jnp.pad((mask != 0).astype(jnp.int8),
                          ((0, 0), (0, A_pad - A)))
        inputs.append(mask_i8)
        in_specs.append(batched(A_pad))
        kernel = actor_kernel_masked
        bytes_accessed += B * A_pad  # int8
    else:
        kernel = actor_kernel_nomask

    cost = pl.CostEstimate(
        flops=2 * B * (S * H + H * H + H * A_pad),
        transcendentals=B * (A_pad + 1),
        bytes_accessed=int(bytes_accessed),
    )

    out = pl.pallas_call(
        kernel,
        out_shape=jax.ShapeDtypeStruct((B, A_pad), jnp.float32),
        grid=(nb,),
        in_specs=in_specs,
        out_specs=batched(A_pad),
        compiler_params=pltpu.CompilerParams(
            dimension_semantics=("parallel",)),
        cost_estimate=cost,
    )(*inputs)

    # Padded columns are exactly 0; slice back to the module's (B, A) contract.
    return out[:, :A]


# ----------------------------- references ------------------------------------

def actor_net_ref_f32(x, params, mask=None):
    """Pure-f32 reference (faithful to the PyTorch module)."""
    h = jnp.maximum(x @ params["w1"] + params["b1"], 0.0)
    h = jnp.maximum(h @ params["w2"] + params["b2"], 0.0)
    logits = h @ params["w3"] + params["b3"]
    if mask is not None:
        logits = logits + (mask - 1.0) * 1e9
    return jax.nn.softmax(logits, axis=-1)


def actor_net_ref_bf16(x, prep, mask=None):
    """Dtype-matched reference (bf16 weights, f32 accumulate)."""
    xb = x.astype(jnp.bfloat16)
    h = jnp.maximum(jnp.dot(xb, prep["w1"], preferred_element_type=jnp.float32)
                    + prep["b1"], 0.0).astype(jnp.bfloat16)
    h = jnp.maximum(jnp.dot(h, prep["w2"], preferred_element_type=jnp.float32)
                    + prep["b2"], 0.0).astype(jnp.bfloat16)
    logits = (jnp.dot(h, prep["w3"], preferred_element_type=jnp.float32)
              + prep["b3"])[:, :prep["action_dim"]]
    if mask is not None:
        logits = logits + (mask - 1.0) * 1e9
    return jax.nn.softmax(logits, axis=-1)


# ----------------------------- demo / check ----------------------------------

if __name__ == "__main__":
    # Small shapes consistent with the module (state/hidden scaled down;
    # action_dim = 10 stands in for len(M)).  B=200 exercises the tile_b cap
    # (2 grid steps) and a ragged, un-padded last batch block.
    B, S, H, A = 200, 256, 128, 10

    key = jax.random.PRNGKey(0)
    k_param, k_x, k_mask = jax.random.split(key, 3)

    params = init_params(k_param, S, H, A)
    prep = prepare_params(params)

    x = jax.random.normal(k_x, (B, S), dtype=jnp.float32)
    mask = (jax.random.uniform(k_mask, (B, A)) > 0.3).astype(jnp.float32)
    mask = mask.at[:, 0].set(1.0)  # at least one legal action per row

    out_masked = jax.block_until_ready(actor_net_pallas(x, prep, mask))
    out_nomask = jax.block_until_ready(actor_net_pallas(x, prep, None))

    ref_masked_bf16 = actor_net_ref_bf16(x, prep, mask)
    ref_nomask_bf16 = actor_net_ref_bf16(x, prep, None)
    ref_masked_f32 = actor_net_ref_f32(x, params, mask)

    assert out_masked.shape == (B, A)
    assert out_nomask.shape == (B, A)
    # Dtype-matched reference (bf16 weights, f32 accumulate): tight tolerance.
    assert jnp.allclose(out_masked, ref_masked_bf16, atol=5e-3, rtol=0.0)
    assert jnp.allclose(out_nomask, ref_nomask_bf16, atol=5e-3, rtol=0.0)
    # Full-f32 PyTorch-style reference: loose tolerance (bf16 weights).
    assert jnp.allclose(out_masked, ref_masked_f32, atol=5e-2, rtol=0.0)
    # Probabilities sum to 1 along the action axis (padded columns contribute 0).
    assert jnp.allclose(jnp.sum(out_masked, axis=-1), 1.0, atol=1e-3)
    assert jnp.allclose(jnp.sum(out_nomask, axis=-1), 1.0, atol=1e-3)
    # Masked-out actions get (numerically) zero probability.
    assert float(jnp.max(jnp.where(mask == 0.0, out_masked, 0.0))) < 1e-6

    print("KERNEL_OK")
</pallas_src>

<mosaic_0001>
module attributes {stable_mosaic.version = 11 : i64} {
  func.func @actor_kernel_masked(%arg0: i32, %arg1: memref<128x256xf32, #tpu.memory_space<vmem>>, %arg2: memref<256x128xbf16, #tpu.memory_space<vmem>>, %arg3: memref<1x128xf32, #tpu.memory_space<vmem>>, %arg4: memref<128x128xbf16, #tpu.memory_space<vmem>>, %arg5: memref<1x128xf32, #tpu.memory_space<vmem>>, %arg6: memref<128x128xbf16, #tpu.memory_space<vmem>>, %arg7: memref<1x128xf32, #tpu.memory_space<vmem>>, %arg8: memref<128x128xi8, #tpu.memory_space<vmem>>, %arg9: memref<128x128xf32, #tpu.memory_space<vmem>>) attributes {dimension_semantics = [#tpu.dimension_semantics<parallel>], iteration_bounds = array<i64: 2>, scalar_prefetch = 0 : i64, scratch_operands = 0 : i64, tpu.core_type = #tpu.core_type<tc>, window_params = [{transform_indices = @transform_0, window_bounds = array<i64: 128, 256>}, {pipeline_mode = #tpu.pipeline_mode<synchronous>, transform_indices = @transform_1, window_bounds = array<i64: 256, 128>}, {pipeline_mode = #tpu.pipeline_mode<synchronous>, transform_indices = @transform_2, window_bounds = array<i64: 1, 128>}, {pipeline_mode = #tpu.pipeline_mode<synchronous>, transform_indices = @transform_3, window_bounds = array<i64: 128, 128>}, {pipeline_mode = #tpu.pipeline_mode<synchronous>, transform_indices = @transform_4, window_bounds = array<i64: 1, 128>}, {pipeline_mode = #tpu.pipeline_mode<synchronous>, transform_indices = @transform_5, window_bounds = array<i64: 128, 128>}, {pipeline_mode = #tpu.pipeline_mode<synchronous>, transform_indices = @transform_6, window_bounds = array<i64: 1, 128>}, {transform_indices = @transform_7, window_bounds = array<i64: 128, 128>}, {transform_indices = @transform_8, window_bounds = array<i64: 128, 128>}]} {
    %c0 = arith.constant 0 : index
    %c0_0 = arith.constant 0 : index
    %0 = vector.load %arg1[%c0, %c0_0] : memref<128x256xf32, #tpu.memory_space<vmem>>, vector<128x256xf32>
    %1 = arith.truncf %0 : vector<128x256xf32> to vector<128x256xbf16>
    %c0_1 = arith.constant 0 : index
    %c0_2 = arith.constant 0 : index
    %2 = vector.load %arg2[%c0_1, %c0_2] : memref<256x128xbf16, #tpu.memory_space<vmem>>, vector<256x128xbf16>
    %cst = arith.constant dense<0.000000e+00> : vector<128x128xf32>
    %3 = tpu.matmul %1, %2, %cst {dimension_numbers = #tpu.dot_dimension_numbers<[1], [0], [0], [1], [0, 0, 1, 1], [], []>} : vector<128x256xbf16>, vector<256x128xbf16>, vector<128x128xf32> -> vector<128x128xf32>
    %c0_3 = arith.constant 0 : index
    %c0_4 = arith.constant 0 : index
    %4 = vector.load %arg3[%c0_3, %c0_4] : memref<1x128xf32, #tpu.memory_space<vmem>>, vector<1x128xf32>
    %5 = vector.broadcast %4 : vector<1x128xf32> to vector<128x128xf32>
    %6 = arith.addf %3, %5 : vector<128x128xf32>
    %cst_5 = arith.constant 0.000000e+00 : f32
    %7 = vector.broadcast %cst_5 : f32 to vector<128x128xf32>
    %8 = arith.maximumf %6, %7 : vector<128x128xf32>
    %9 = arith.truncf %8 : vector<128x128xf32> to vector<128x128xbf16>
    %c0_6 = arith.constant 0 : index
    %c0_7 = arith.constant 0 : index
    %10 = vector.load %arg4[%c0_6, %c0_7] : memref<128x128xbf16, #tpu.memory_space<vmem>>, vector<128x128xbf16>
    %cst_8 = arith.constant dense<0.000000e+00> : vector<128x128xf32>
    %11 = tpu.matmul %9, %10, %cst_8 {dimension_numbers = #tpu.dot_dimension_numbers<[1], [0], [0], [1], [0, 0, 1, 1], [], []>} : vector<128x128xbf16>, vector<128x128xbf16>, vector<128x128xf32> -> vector<128x128xf32>
    %c0_9 = arith.constant 0 : index
    %c0_10 = arith.constant 0 : index
    %12 = vector.load %arg5[%c0_9, %c0_10] : memref<1x128xf32, #tpu.memory_space<vmem>>, vector<1x128xf32>
    %13 = vector.broadcast %12 : vector<1x128xf32> to vector<128x128xf32>
    %14 = arith.addf %11, %13 : vector<128x128xf32>
    %cst_11 = arith.constant 0.000000e+00 : f32
    %15 = vector.broadcast %cst_11 : f32 to vector<128x128xf32>
    %16 = arith.maximumf %14, %15 : vector<128x128xf32>
    %17 = arith.truncf %16 : vector<128x128xf32> to vector<128x128xbf16>
    %c0_12 = arith.constant 0 : index
    %c0_13 = arith.constant 0 : index
    %18 = vector.load %arg6[%c0_12, %c0_13] : memref<128x128xbf16, #tpu.memory_space<vmem>>, vector<128x128xbf16>
    %cst_14 = arith.constant dense<0.000000e+00> : vector<128x128xf32>
    %19 = tpu.matmul %17, %18, %cst_14 {dimension_numbers = #tpu.dot_dimension_numbers<[1], [0], [0], [1], [0, 0, 1, 1], [], []>} : vector<128x128xbf16>, vector<128x128xbf16>, vector<128x128xf32> -> vector<128x128xf32>
    %c0_15 = arith.constant 0 : index
    %c0_16 = arith.constant 0 : index
    %20 = vector.load %arg7[%c0_15, %c0_16] : memref<1x128xf32, #tpu.memory_space<vmem>>, vector<1x128xf32>
    %21 = vector.broadcast %20 : vector<1x128xf32> to vector<128x128xf32>
    %22 = arith.addf %19, %21 : vector<128x128xf32>
    %c0_17 = arith.constant 0 : index
    %c0_18 = arith.constant 0 : index
    %23 = vector.load %arg8[%c0_17, %c0_18] : memref<128x128xi8, #tpu.memory_space<vmem>>, vector<128x128xi8>
    %24 = arith.sitofp %23 : vector<128x128xi8> to vector<128x128xf32>
    %cst_19 = arith.constant 1.000000e+00 : f32
    %25 = vector.broadcast %cst_19 : f32 to vector<128x128xf32>
    %26 = arith.subf %24, %25 : vector<128x128xf32>
    %cst_20 = arith.constant 1.000000e+09 : f32
    %27 = vector.broadcast %cst_20 : f32 to vector<128x128xf32>
    %28 = arith.mulf %26, %27 : vector<128x128xf32>
    %29 = arith.addf %22, %28 : vector<128x128xf32>
    %cst_21 = arith.constant dense<0xFF800000> : vector<128xf32>
    %30 = vector.multi_reduction <maximumf>, %29, %cst_21 [1] : vector<128x128xf32> to vector<128xf32>
    %31 = vector.shape_cast %30 : vector<128xf32> to vector<128x1xf32>
    %32 = vector.broadcast %31 : vector<128x1xf32> to vector<128x128xf32>
    %33 = arith.subf %29, %32 : vector<128x128xf32>
    %34 = math.exp %33 : vector<128x128xf32>
    %cst_22 = arith.constant dense<0.000000e+00> : vector<128xf32>
    %35 = vector.multi_reduction <add>, %34, %cst_22 [1] : vector<128x128xf32> to vector<128xf32>
    %36 = vector.shape_cast %35 : vector<128xf32> to vector<128x1xf32>
    %37 = tpu.reciprocal %36 : vector<128x1xf32> -> vector<128x1xf32>
    %38 = vector.broadcast %37 : vector<128x1xf32> to vector<128x128xf32>
    %39 = arith.mulf %34, %38 : vector<128x128xf32>
    %c0_23 = arith.constant 0 : index
    %c0_24 = arith.constant 0 : index
    %40 = vector.load %arg9[%c0_23, %c0_24] : memref<128x128xf32, #tpu.memory_space<vmem>>, vector<128x128xf32>
    tpu.vector_store %arg9[%c0_23, %c0_24], %39 {strides = array<i32>} : memref<128x128xf32, #tpu.memory_space<vmem>>, vector<128x128xf32>,
    return
  }
  func.func @transform_0(%arg0: i32) -> (i32, i32) {
    %c0_i32 = arith.constant 0 : i32
    %c0_i32_0 = arith.constant 0 : i32
    return %arg0, %c0_i32 : i32, i32
  }
  func.func @transform_1(%arg0: i32) -> (i32, i32) {
    %c0_i32 = arith.constant 0 : i32
    %c0_i32_0 = arith.constant 0 : i32
    %c0_i32_1 = arith.constant 0 : i32
    return %c0_i32, %c0_i32_0 : i32, i32
  }
  func.func @transform_2(%arg0: i32) -> (i32, i32) {
    %c0_i32 = arith.constant 0 : i32
    %c0_i32_0 = arith.constant 0 : i32
    %c0_i32_1 = arith.constant 0 : i32
    return %c0_i32, %c0_i32_0 : i32, i32
  }
  func.func @transform_3(%arg0: i32) -> (i32, i32) {
    %c0_i32 = arith.constant 0 : i32
    %c0_i32_0 = arith.constant 0 : i32
    %c0_i32_1 = arith.constant 0 : i32
    return %c0_i32, %c0_i32_0 : i32, i32
  }
  func.func @transform_4(%arg0: i32) -> (i32, i32) {
    %c0_i32 = arith.constant 0 : i32
    %c0_i32_0 = arith.constant 0 : i32
    %c0_i32_1 = arith.constant 0 : i32
    return %c0_i32, %c0_i32_0 : i32, i32
  }
  func.func @transform_5(%arg0: i32) -> (i32, i32) {
    %c0_i32 = arith.constant 0 : i32
    %c0_i32_0 = arith.constant 0 : i32
    %c0_i32_1 = arith.constant 0 : i32
    return %c0_i32, %c0_i32_0 : i32, i32
  }
  func.func @transform_6(%arg0: i32) -> (i32, i32) {
    %c0_i32 = arith.constant 0 : i32
    %c0_i32_0 = arith.constant 0 : i32
    %c0_i32_1 = arith.constant 0 : i32
    return %c0_i32, %c0_i32_0 : i32, i32
  }
  func.func @transform_7(%arg0: i32) -> (i32, i32) {
    %c0_i32 = arith.constant 0 : i32
    %c0_i32_0 = arith.constant 0 : i32
    return %arg0, %c0_i32 : i32, i32
  }
  func.func @transform_8(%arg0: i32) -> (i32, i32) {
    %c0_i32 = arith.constant 0 : i32
    %c0_i32_0 = arith.constant 0 : i32
    return %arg0, %c0_i32 : i32, i32
  }
}

</mosaic_0001>

<llo_original>
// kernel: tpu_custom_call.1
$region0: #{tpu_custom_call.1}
  #allocation0 [shape = 'u32[]', space=smem, size = 0x4, offset = 0x4, fixed_abs, tag = 'smem constant byte address 0x4 - core index']
  #allocation1 [shape = 'u32[72,128]{1,0:T(1,128)}', space=vmem, size = 0x9000, scoped, tag = 'internal scratch']
  %s0 = inlined_call_operand.hbm [shape: f32[200,256], index: 0, kind: input, shape index: {}]
  %s1 = inlined_call_operand.hbm [shape: bf16[256,128], index: 1, kind: input, shape index: {}]
  %s2 = inlined_call_operand.vmem [shape: f32[1,128], index: 2, kind: input, shape index: {}]
  %s3 = inlined_call_operand.hbm [shape: bf16[128,128], index: 3, kind: input, shape index: {}]
  %s4 = inlined_call_operand.vmem [shape: f32[1,128], index: 4, kind: input, shape index: {}]
  %s5 = inlined_call_operand.hbm [shape: bf16[128,128], index: 5, kind: input, shape index: {}]
  %s6 = inlined_call_operand.vmem [shape: f32[1,128], index: 6, kind: input, shape index: {}]
  %s7 = inlined_call_operand.hbm [shape: s8[200,128], index: 7, kind: input, shape index: {}]
  %s8 = inlined_call_operand.hbm [shape: f32[200,128], index: 8, kind: output, shape index: {}]
  %s9 = sld [smem:[#allocation0]]
  $region85: #{tpu_custom_call.1} parent=0
    _
  %s11 = ssub.s32 1, %s9
  %s12 = scalar_select 0, %s11, %s9
  $region1: #{tpu_custom_call.1} parent=0
    #allocation2 [shape = 'u8[262144]{0}', space=vmem, size = 0x40000, scoped, tag = 'input window, operand 0']
    #allocation3 [shape = 's32[2]{0}', space=sflag, size = 0x8, scoped, tag = 'scoped memory for tpu_custom_call.1']
    #allocation4 [shape = 's32[2]{0}', space=sflag, size = 0x8, scoped, tag = 'scoped memory for tpu_custom_call.1']
    #allocation5 [shape = 'u8[65536]{0}', space=vmem, size = 0x10000, scoped, tag = 'input window, operand 1, single buffered']
    #allocation6 [shape = 's32[1]{0}', space=sflag, size = 0x4, scoped, tag = 'scoped memory for tpu_custom_call.1']
    #allocation7 [shape = 'u8[32768]{0}', space=vmem, size = 0x8000, scoped, tag = 'input window, operand 3, single buffered']
    #allocation8 [shape = 'u8[32768]{0}', space=vmem, size = 0x8000, scoped, tag = 'input window, operand 5, single buffered']
    #allocation9 [shape = 's32[1]{0}', space=sflag, size = 0x4, scoped, tag = 'scoped memory for tpu_custom_call.1']
    #allocation10 [shape = 'u8[32768]{0}', space=vmem, size = 0x8000, scoped, tag = 'input window, operand 7']
    #allocation11 [shape = 'u8[131072]{0}', space=vmem, size = 0x20000, scoped, tag = 'output window, operand 0']
    %13 = vsyncpa [#allocation3], 0
    %s14 = scalar_lea.sflag [#allocation3], 1
    %15 = vsyncpa %s14, 0
    %16 = vsyncpa [#allocation6], 0
    %17 = vsyncpa [#allocation9], 0
    %18 = vsyncpa [#allocation4], 0
    %s19 = scalar_lea.sflag [#allocation4], 1
    %20 = vsyncpa %s19, 0
    loop: start=0, step=1, limit=4
    $region2: #{tpu_custom_call.1} parent=1 // loop_pre_header
      _
    $region3: #{tpu_custom_call.1} parent=1 // loop_header
      %s22 = sphi 0, %s26
      %p23 = scmp.ge.s32.totalorder %s22, 4
      %s32 = sphi 0, %s34
      %s35 = sphi 0, %s32
      %s36 = sphi 0, %s35
      %s52 = sphi 0, %s36
      %s56 = sphi 0, %s56
      %s58 = sphi 0, %s56
      %s59 = sphi 0, %s58
      %s73 = sphi 0, %s59
      %s77 = sphi 0, %s77
      %s79 = sphi 0, %s77
      %s80 = sphi 0, %s79
      %s94 = sphi 0, %s80
      %s98 = sphi 0, %s98
      %s100 = sphi 0, %s98
      %s101 = sphi 0, %s100
      %s115 = sphi 0, %s101
      %s119 = sphi 0, %s119
      %s121 = sphi 0, %s119
      %s122 = sphi 0, %s121
      %s136 = sphi 0, %s122
      %s140 = sphi 0, %s140
      %s142 = sphi 0, %s140
      %s143 = sphi 0, %s142
      %s157 = sphi 0, %s143
      %s161 = sphi 0, %s161
      %s163 = sphi 0, %s161
      %s164 = sphi 0, %s163
      %s178 = sphi 0, %s164
      %s184 = sphi 0, %s186
      %s187 = sphi 0, %s184
      %s188 = sphi 0, %s187
      %s204 = sphi 0, %s188
      %s210 = sphi 0, %s212
      %s213 = sphi 0, %s210
      %s214 = sphi 0, %s213
      %s230 = sphi 0, %s214
    $region4: #{tpu_custom_call.1} parent=1 // loop_header_branch
      %25 = sbr.rel (%p23) target = $region8
    $region5: #{tpu_custom_call.1} parent=1 // loop_body
      %s27 = ssub.s32 %s22, 1
      %s28 = ssub.s32 %s22, 2
      %s29 = sadd.s32 %s22, 1
      %s30 = ssub.s32 %s22, %s29
      %p31 = scmp.eq.s32.totalorder %s30, 0
      %s33 = sadd.s32 %s32, 1
      %s34 = scalar_select %p31, %s32, %s33
      %p37 = pneg %p31
      %p38 = scmp.eq.s32.totalorder %s22, 1
      %p39 = por %p37, %p38
      %p40 = scmp.ne.s32.totalorder %s32, %s35
      %p41 = scmp.eq.s32.totalorder %s22, 0
      %p42 = por %p40, %p41
      %p43 = scmp.ne.s32.totalorder %s32, %s35
      %p44 = scmp.eq.s32.totalorder %s27, 1
      %p45 = por %p43, %p44
      %p46 = scmp.ne.s32.totalorder %s35, %s36
      %p47 = scmp.eq.s32.totalorder %s27, 0
      %p48 = por %p46, %p47
      %p49 = scmp.ne.s32.totalorder %s35, %s36
      %p50 = scmp.eq.s32.totalorder %s28, 1
      %p51 = por %p49, %p50
      %p53 = scmp.ne.s32.totalorder %s36, %s52
      %p54 = scmp.eq.s32.totalorder %s28, 0
      %p55 = por %p53, %p54
      %s57 = sadd.s32 %s56, 1
      %p60 = scmp.eq.s32.totalorder %s22, 1
      %p61 = scmp.ne.s32.totalorder %s56, %s58
      %p62 = scmp.eq.s32.totalorder %s22, 0
      %p63 = por %p61, %p62
      %p64 = scmp.ne.s32.totalorder %s56, %s58
      %p65 = scmp.eq.s32.totalorder %s27, 1
      %p66 = por %p64, %p65
      %p67 = scmp.ne.s32.totalorder %s58, %s59
      %p68 = scmp.eq.s32.totalorder %s27, 0
      %p69 = por %p67, %p68
      %p70 = scmp.ne.s32.totalorder %s58, %s59
      %p71 = scmp.eq.s32.totalorder %s28, 1
      %p72 = por %p70, %p71
      %p74 = scmp.ne.s32.totalorder %s59, %s73
      %p75 = scmp.eq.s32.totalorder %s28, 0
      %p76 = por %p74, %p75
      %s78 = sadd.s32 %s77, 1
      %p81 = scmp.eq.s32.totalorder %s22, 1
      %p82 = scmp.ne.s32.totalorder %s77, %s79
      %p83 = scmp.eq.s32.totalorder %s22, 0
      %p84 = por %p82, %p83
      %p85 = scmp.ne.s32.totalorder %s77, %s79
      %p86 = scmp.eq.s32.totalorder %s27, 1
      %p87 = por %p85, %p86
      %p88 = scmp.ne.s32.totalorder %s79, %s80
      %p89 = scmp.eq.s32.totalorder %s27, 0
      %p90 = por %p88, %p89
      %p91 = scmp.ne.s32.totalorder %s79, %s80
      %p92 = scmp.eq.s32.totalorder %s28, 1
      %p93 = por %p91, %p92
      %p95 = scmp.ne.s32.totalorder %s80, %s94
      %p96 = scmp.eq.s32.totalorder %s28, 0
      %p97 = por %p95, %p96
      %s99 = sadd.s32 %s98, 1
      %p102 = scmp.eq.s32.totalorder %s22, 1
      %p103 = scmp.ne.s32.totalorder %s98, %s100
      %p104 = scmp.eq.s32.totalorder %s22, 0
      %p105 = por %p103, %p104
      %p106 = scmp.ne.s32.totalorder %s98, %s100
      %p107 = scmp.eq.s32.totalorder %s27, 1
      %p108 = por %p106, %p107
      %p109 = scmp.ne.s32.totalorder %s100, %s101
      %p110 = scmp.eq.s32.totalorder %s27, 0
      %p111 = por %p109, %p110
      %p112 = scmp.ne.s32.totalorder %s100, %s101
      %p113 = scmp.eq.s32.totalorder %s28, 1
      %p114 = por %p112, %p113
      %p116 = scmp.ne.s32.totalorder %s101, %s115
      %p117 = scmp.eq.s32.totalorder %s28, 0
      %p118 = por %p116, %p117
      %s120 = sadd.s32 %s119, 1
      %p123 = scmp.eq.s32.totalorder %s22, 1
      %p124 = scmp.ne.s32.totalorder %s119, %s121
      %p125 = scmp.eq.s32.totalorder %s22, 0
      %p126 = por %p124, %p125
      %p127 = scmp.ne.s32.totalorder %s119, %s121
      %p128 = scmp.eq.s32.totalorder %s27, 1
      %p129 = por %p127, %p128
      %p130 = scmp.ne.s32.totalorder %s121, %s122
      %p131 = scmp.eq.s32.totalorder %s27, 0
      %p132 = por %p130, %p131
      %p133 = scmp.ne.s32.totalorder %s121, %s122
      %p134 = scmp.eq.s32.totalorder %s28, 1
      %p135 = por %p133, %p134
      %p137 = scmp.ne.s32.totalorder %s122, %s136
      %p138 = scmp.eq.s32.totalorder %s28, 0
      %p139 = por %p137, %p138
      %s141 = sadd.s32 %s140, 1
      %p144 = scmp.eq.s32.totalorder %s22, 1
      %p145 = scmp.ne.s32.totalorder %s140, %s142
      %p146 = scmp.eq.s32.totalorder %s22, 0
      %p147 = por %p145, %p146
      %p148 = scmp.ne.s32.totalorder %s140, %s142
      %p149 = scmp.eq.s32.totalorder %s27, 1
      %p150 = por %p148, %p149
      %p151 = scmp.ne.s32.totalorder %s142, %s143
      %p152 = scmp.eq.s32.totalorder %s27, 0
      %p153 = por %p151, %p152
      %p154 = scmp.ne.s32.totalorder %s142, %s143
      %p155 = scmp.eq.s32.totalorder %s28, 1
      %p156 = por %p154, %p155
      %p158 = scmp.ne.s32.totalorder %s143, %s157
      %p159 = scmp.eq.s32.totalorder %s28, 0
      %p160 = por %p158, %p159
      %s162 = sadd.s32 %s161, 1
      %p165 = scmp.eq.s32.totalorder %s22, 1
      %p166 = scmp.ne.s32.totalorder %s161, %s163
      %p167 = scmp.eq.s32.totalorder %s22, 0
      %p168 = por %p166, %p167
      %p169 = scmp.ne.s32.totalorder %s161, %s163
      %p170 = scmp.eq.s32.totalorder %s27, 1
      %p171 = por %p169, %p170
      %p172 = scmp.ne.s32.totalorder %s163, %s164
      %p173 = scmp.eq.s32.totalorder %s27, 0
      %p174 = por %p172, %p173
      %p175 = scmp.ne.s32.totalorder %s163, %s164
      %p176 = scmp.eq.s32.totalorder %s28, 1
      %p177 = por %p175, %p176
      %p179 = scmp.ne.s32.totalorder %s164, %s178
      %p180 = scmp.eq.s32.totalorder %s28, 0
      %p181 = por %p179, %p180
      %s182 = ssub.s32 %s22, %s29
      %p183 = scmp.eq.s32.totalorder %s182, 0
      %s185 = sadd.s32 %s184, 1
      %s186 = scalar_select %p183, %s184, %s185
      %p189 = pneg %p183
      %p190 = scmp.eq.s32.totalorder %s22, 1
      %p191 = por %p189, %p190
      %p192 = scmp.ne.s32.totalorder %s184, %s187
      %p193 = scmp.eq.s32.totalorder %s22, 0
      %p194 = por %p192, %p193
      %p195 = scmp.ne.s32.totalorder %s184, %s187
      %p196 = scmp.eq.s32.totalorder %s27, 1
      %p197 = por %p195, %p196
      %p198 = scmp.ne.s32.totalorder %s187, %s188
      %p199 = scmp.eq.s32.totalorder %s27, 0
      %p200 = por %p198, %p199
      %p201 = scmp.ne.s32.totalorder %s187, %s188
      %p202 = scmp.eq.s32.totalorder %s28, 1
      %p203 = por %p201, %p202
      %p205 = scmp.ne.s32.totalorder %s188, %s204
      %p206 = scmp.eq.s32.totalorder %s28, 0
      %p207 = por %p205, %p206
      %s208 = ssub.s32 %s22, %s29
      %p209 = scmp.eq.s32.totalorder %s208, 0
      %s211 = sadd.s32 %s210, 1
      %s212 = scalar_select %p209, %s210, %s211
      %p215 = pneg %p209
      %p216 = scmp.eq.s32.totalorder %s22, 1
      %p217 = por %p215, %p216
      %p218 = scmp.ne.s32.totalorder %s210, %s213
      %p219 = scmp.eq.s32.totalorder %s22, 0
      %p220 = por %p218, %p219
      %p221 = scmp.ne.s32.totalorder %s210, %s213
      %p222 = scmp.eq.s32.totalorder %s27, 1
      %p223 = por %p221, %p222
      %p224 = scmp.ne.s32.totalorder %s213, %s214
      %p225 = scmp.eq.s32.totalorder %s27, 0
      %p226 = por %p224, %p225
      %p227 = scmp.ne.s32.totalorder %s213, %s214
      %p228 = scmp.eq.s32.totalorder %s28, 1
      %p229 = por %p227, %p228
      %p231 = scmp.ne.s32.totalorder %s214, %s230
      %p232 = scmp.eq.s32.totalorder %s28, 0
      %p233 = por %p231, %p232
      %p234 = scmp.le.s32.totalorder 1, %s22
      %p235 = scmp.lt.s32.totalorder %s22, 3
      %p236 = pnand %p234, %p235
      %p237 = pneg %p236
      // Predicated region
      $region9: #{tpu_custom_call.1} parent=5 // pred_check
        _
      $region10: #{tpu_custom_call.1} parent=5 // pred_check_branch
        %239 = sbr.rel (%p236) target = $region12
      $region11: #{tpu_custom_call.1} parent=5 // pred_region
        %s240 = ssub.s32 %s22, 1
        // Predicated region
        $region13: #{tpu_custom_call.1} parent=11 // pred_check
          %p241 = pneg %p69
        $region14: #{tpu_custom_call.1} parent=11 // pred_check_branch
          %243 = sbr.rel (%p241) target = $region16
        $region15: #{tpu_custom_call.1} parent=11 // pred_region
          %245 = vsyncadd [#allocation6], 0
          %s246 = sshll.u32 %s1, 4
          %s247 = int_to_ptr.hbm [resolvable:$true] %s246
          %s248 = sshll.u32 [#allocation5], 4
          %s249 = int_to_ptr.vmem [resolvable:$true] %s248
          %254 = dma.hbm_to_vmem [thread:$0]  %s247, 2048, %s249, [#allocation6], 64, 64, 4
        $region16: #{tpu_custom_call.1} parent=11 // pred_fallthru
          _
        // Predicated region
        $region17: #{tpu_custom_call.1} parent=11 // pred_check
          %p255 = pneg %p90
        $region18: #{tpu_custom_call.1} parent=11 // pred_check_branch
          %257 = sbr.rel (%p255) target = $region20
        $region19: #{tpu_custom_call.1} parent=11 // pred_region
          _
        $region20: #{tpu_custom_call.1} parent=11 // pred_fallthru
          _
        // Predicated region
        $region21: #{tpu_custom_call.1} parent=11 // pred_check
          %p258 = pneg %p111
        $region22: #{tpu_custom_call.1} parent=11 // pred_check_branch
          %260 = sbr.rel (%p258) target = $region24
        $region23: #{tpu_custom_call.1} parent=11 // pred_region
          %262 = vsyncadd [#allocation6], 0
          %s263 = sshll.u32 %s3, 4
          %s264 = int_to_ptr.hbm [resolvable:$true] %s263
          %s265 = sshll.u32 [#allocation7], 4
          %s266 = int_to_ptr.vmem [resolvable:$true] %s265
          %271 = dma.hbm_to_vmem [thread:$0]  %s264, 1024, %s266, [#allocation6], 64, 64, 4
        $region24: #{tpu_custom_call.1} parent=11 // pred_fallthru
          _
        // Predicated region
        $region25: #{tpu_custom_call.1} parent=11 // pred_check
          %p272 = pneg %p132
        $region26: #{tpu_custom_call.1} parent=11 // pred_check_branch
          %274 = sbr.rel (%p272) target = $region28
        $region27: #{tpu_custom_call.1} parent=11 // pred_region
          _
        $region28: #{tpu_custom_call.1} parent=11 // pred_fallthru
          _
        // Predicated region
        $region29: #{tpu_custom_call.1} parent=11 // pred_check
          %p275 = pneg %p153
        $region30: #{tpu_custom_call.1} parent=11 // pred_check_branch
          %277 = sbr.rel (%p275) target = $region32
        $region31: #{tpu_custom_call.1} parent=11 // pred_region
          %279 = vsyncadd [#allocation9], 0
          %s280 = sshll.u32 %s5, 4
          %s281 = int_to_ptr.hbm [resolvable:$true] %s280
          %s282 = sshll.u32 [#allocation8], 4
          %s283 = int_to_ptr.vmem [resolvable:$true] %s282
          %288 = dma.hbm_to_vmem [thread:$0]  %s281, 1024, %s283, [#allocation9], 64, 64, 4
        $region32: #{tpu_custom_call.1} parent=11 // pred_fallthru
          _
        // Predicated region
        $region33: #{tpu_custom_call.1} parent=11 // pred_check
          %p289 = pneg %p174
        $region34: #{tpu_custom_call.1} parent=11 // pred_check_branch
          %291 = sbr.rel (%p289) target = $region36
        $region35: #{tpu_custom_call.1} parent=11 // pred_region
          _
        $region36: #{tpu_custom_call.1} parent=11 // pred_fallthru
          _
      $region12: #{tpu_custom_call.1} parent=5 // pred_fallthru
        _
      %p292 = scmp.lt.s32.totalorder %s22, 2
      // Predicated region
      $region37: #{tpu_custom_call.1} parent=5 // pred_check
        %p293 = pneg %p292
      $region38: #{tpu_custom_call.1} parent=5 // pred_check_branch
        %295 = sbr.rel (%p293) target = $region40
      $region39: #{tpu_custom_call.1} parent=5 // pred_region
        // Predicated region
        $region41: #{tpu_custom_call.1} parent=39 // pred_check
          %p296 = pneg %p42
        $region42: #{tpu_custom_call.1} parent=39 // pred_check_branch
          %298 = sbr.rel (%p296) target = $region44
        $region43: #{tpu_custom_call.1} parent=39 // pred_region
          %s299 = sand.u32 %s22, 1
          %s300 = scalar_lea.sflag [#allocation3], %s299
          %s301 = sand.u32 %s32, 1
          %s302 = smul.addr %s301, 256
          %s303 = scalar_lea.vmem [#allocation2], %s302
          %s304 = smul.u32 16, %s22
          %s305 = ssub.s32 25, %s304
          %p306 = scmp.lt.s32.totalorder %s305, 16
          %s307 = scalar_select %p306, %s305, 16
          %s308 = smul.u32 8, %s307
          %s309 = smul.u32 %s308, 2
          %s310 = ssub.s32 256, %s309
          %s311 = sshll.u32 %s310, 4
          %312 = vsyncadd %s300, %s311
          %p313 = scmp.ne.s32.totalorder 0, %s309
          %s314 = smul.addr %s304, 2
          %s315 = smul.addr %s314, 8
          %s316 = scalar_lea.hbm %s0, %s315
          %s317 = smul.u32 16, %s307
          %s318 = sshll.u32 %s316, 4
          %s319 = int_to_ptr.hbm [resolvable:$true] %s318
          %s320 = sshll.u32 %s303, 4
          %s321 = int_to_ptr.vmem [resolvable:$true] %s320
          %s322 = sshll.u32 %s317, 4
          %326 = dma.hbm_to_vmem [thread:$0]  (%p313), %s319, %s322, %s321, %s300, 256, 256, 16
        $region44: #{tpu_custom_call.1} parent=39 // pred_fallthru
          _
        // Predicated region
        $region45: #{tpu_custom_call.1} parent=39 // pred_check
          %p327 = pneg %p194
        $region46: #{tpu_custom_call.1} parent=39 // pred_check_branch
          %329 = sbr.rel (%p327) target = $region48
        $region47: #{tpu_custom_call.1} parent=39 // pred_region
          %s330 = sand.u32 %s22, 1
          %s331 = scalar_lea.sflag [#allocation3], %s330
          %s332 = sand.u32 %s184, 1
          %s333 = smul.addr %s332, 32
          %s334 = scalar_lea.vmem [#allocation10], %s333
          %s335 = smul.u32 16, %s22
          %s336 = ssub.s32 25, %s335
          %p337 = scmp.lt.s32.totalorder %s336, 16
          %s338 = scalar_select %p337, %s336, 16
          %s339 = smul.u32 2, %s338
          %s340 = ssub.s32 32, %s339
          %s341 = sshll.u32 %s340, 4
          %342 = vsyncadd %s331, %s341
          %p343 = scmp.ne.s32.totalorder 0, %s339
          %s344 = smul.addr %s335, 2
          %s345 = scalar_lea.hbm %s7, %s344
          %s346 = smul.u32 2, %s338
          %s347 = sshll.u32 %s345, 4
          %s348 = int_to_ptr.hbm [resolvable:$true] %s347
          %s349 = sshll.u32 %s334, 4
          %s350 = int_to_ptr.vmem [resolvable:$true] %s349
          %s351 = sshll.u32 %s346, 4
          %355 = dma.hbm_to_vmem [thread:$0]  (%p343), %s348, %s351, %s350, %s331, 32, 32, 2
        $region48: #{tpu_custom_call.1} parent=39 // pred_fallthru
          _
      $region40: #{tpu_custom_call.1} parent=5 // pred_fallthru
        _
      %p356 = scmp.le.s32.totalorder 1, %s22
      %p357 = scmp.lt.s32.totalorder %s22, 3
      %p358 = pnand %p356, %p357
      %p359 = pneg %p358
      // Predicated region
      $region49: #{tpu_custom_call.1} parent=5 // pred_check
        _
      $region50: #{tpu_custom_call.1} parent=5 // pred_check_branch
        %361 = sbr.rel (%p358) target = $region52
      $region51: #{tpu_custom_call.1} parent=5 // pred_region
        %s362 = ssub.s32 %s22, 1
        %s363 = sand.u32 %s27, 1
        %s364 = scalar_lea.sflag [#allocation3], %s363
        %s365 = sand.u32 %s35, 1
        %s366 = smul.addr %s365, 256
        %s367 = scalar_lea.vmem [#allocation2], %s366
        // Predicated region
        $region53: #{tpu_custom_call.1} parent=51 // pred_check
          %p368 = pneg %p48
        $region54: #{tpu_custom_call.1} parent=51 // pred_check_branch
          %370 = sbr.rel (%p368) target = $region56
        $region55: #{tpu_custom_call.1} parent=51 // pred_region
          %372 = dma.done %s364, 4096
        $region56: #{tpu_custom_call.1} parent=51 // pred_fallthru
          _
        // Predicated region
        $region57: #{tpu_custom_call.1} parent=51 // pred_check
          %p373 = pneg %p69
        $region58: #{tpu_custom_call.1} parent=51 // pred_check_branch
          %375 = sbr.rel (%p373) target = $region60
        $region59: #{tpu_custom_call.1} parent=51 // pred_region
          %377 = dma.done [#allocation6], 2048
        $region60: #{tpu_custom_call.1} parent=51 // pred_fallthru
          _
        // Predicated region
        $region61: #{tpu_custom_call.1} parent=51 // pred_check
          %p378 = pneg %p111
        $region62: #{tpu_custom_call.1} parent=51 // pred_check_branch
          %380 = sbr.rel (%p378) target = $region64
        $region63: #{tpu_custom_call.1} parent=51 // pred_region
          %382 = dma.done [#allocation6], 1024
        $region64: #{tpu_custom_call.1} parent=51 // pred_fallthru
          _
        // Predicated region
        $region65: #{tpu_custom_call.1} parent=51 // pred_check
          %p383 = pneg %p153
        $region66: #{tpu_custom_call.1} parent=51 // pred_check_branch
          %385 = sbr.rel (%p383) target = $region68
        $region67: #{tpu_custom_call.1} parent=51 // pred_region
          %387 = dma.done [#allocation9], 1024
        $region68: #{tpu_custom_call.1} parent=51 // pred_fallthru
          _
        %s388 = sand.u32 %s27, 1
        %s389 = scalar_lea.sflag [#allocation3], %s388
        %s390 = sand.u32 %s187, 1
        %s391 = smul.addr %s390, 32
        %s392 = scalar_lea.vmem [#allocation10], %s391
        // Predicated region
        $region69: #{tpu_custom_call.1} parent=51 // pred_check
          %p393 = pneg %p200
        $region70: #{tpu_custom_call.1} parent=51 // pred_check_branch
          %395 = sbr.rel (%p393) target = $region72
        $region71: #{tpu_custom_call.1} parent=51 // pred_region
          %397 = dma.done %s389, 512
        $region72: #{tpu_custom_call.1} parent=51 // pred_fallthru
          _
        %s398 = sand.u32 %s27, 1
        %s399 = scalar_lea.sflag [#allocation3], %s398
        %s400 = sand.u32 %s35, 1
        %s401 = smul.addr %s400, 256
        %s402 = scalar_lea.vmem [#allocation2], %s401
        %p403 = pneg %p48
        %p404 = pneg %p45
        %p405 = pneg %p69
        %p406 = pneg %p66
        %p407 = pneg %p90
        %p408 = pneg %p87
        %p409 = pneg %p111
        %p410 = pneg %p108
        %p411 = pneg %p132
        %p412 = pneg %p129
        %p413 = pneg %p153
        %p414 = pneg %p150
        %p415 = pneg %p174
        %p416 = pneg %p171
        %s417 = sand.u32 %s27, 1
        %s418 = scalar_lea.sflag [#allocation3], %s417
        %s419 = sand.u32 %s187, 1
        %s420 = smul.addr %s419, 32
        %s421 = scalar_lea.vmem [#allocation10], %s420
        %p422 = pneg %p200
        %p423 = pneg %p197
        %p424 = pneg %p226
        %p425 = pneg %p223
        %s426 = sand.u32 %s213, 1
        %s427 = scalar_lea.sflag [#allocation4], %s426
        %s428 = sand.u32 %s213, 1
        %s429 = smul.addr %s428, 128
        %s430 = scalar_lea.vmem [#allocation11], %s429
        %s431 = smul.u32 16, %s27
        %s432 = ssub.s32 25, %s431
        %p433 = scmp.lt.s32.totalorder %s432, 16
        %s434 = scalar_select %p433, %s432, 16
        %s435 = smul.u32 8, %s434
        %s436 = smul.u32 %s435, 2
        %s437 = smul.u32 16, %s27
        %s438 = ssub.s32 25, %s437
        %p439 = scmp.lt.s32.totalorder %s438, 16
        %s440 = scalar_select %p439, %s438, 16
        %s441 = smul.u32 2, %s440
        %s442 = smul.u32 16, %s27
        %s443 = ssub.s32 25, %s442
        %p444 = scmp.lt.s32.totalorder %s443, 16
        %s445 = scalar_select %p444, %s443, 16
        %s446 = smul.u32 8, %s445
        %v447 = vld [vmem:[%s367] sm:$0xff]
        %v448 = vld [vmem:[%s367 + $0x8] sm:$0xff]
        %v449 = vld [vmem:[%s367 + $0x10] sm:$0xff]
        %v450 = vld [vmem:[%s367 + $0x18] sm:$0xff]
        %v451 = vld [vmem:[%s367 + $0x20] sm:$0xff]
        %v452 = vld [vmem:[%s367 + $0x28] sm:$0xff]
        %v453 = vld [vmem:[%s367 + $0x30] sm:$0xff]
        %v454 = vld [vmem:[%s367 + $0x38] sm:$0xff]
        %v455 = vld [vmem:[%s367 + $0x40] sm:$0xff]
        %v456 = vld [vmem:[%s367 + $0x48] sm:$0xff]
        %v457 = vld [vmem:[%s367 + $0x50] sm:$0xff]
        %v458 = vld [vmem:[%s367 + $0x58] sm:$0xff]
        %v459 = vld [vmem:[%s367 + $0x60] sm:$0xff]
        %v460 = vld [vmem:[%s367 + $0x68] sm:$0xff]
        %v461 = vld [vmem:[%s367 + $0x70] sm:$0xff]
        %v462 = vld [vmem:[%s367 + $0x78] sm:$0xff]
        %v463 = vld [vmem:[%s367 + $0x80] sm:$0xff]
        %v464 = vld [vmem:[%s367 + $0x88] sm:$0xff]
        %v465 = vld [vmem:[%s367 + $0x90] sm:$0xff]
        %v466 = vld [vmem:[%s367 + $0x98] sm:$0xff]
        %v467 = vld [vmem:[%s367 + $0xa0] sm:$0xff]
        %v468 = vld [vmem:[%s367 + $0xa8] sm:$0xff]
        %v469 = vld [vmem:[%s367 + $0xb0] sm:$0xff]
        %v470 = vld [vmem:[%s367 + $0xb8] sm:$0xff]
        %v471 = vld [vmem:[%s367 + $0xc0] sm:$0xff]
        %v472 = vld [vmem:[%s367 + $0xc8] sm:$0xff]
        %v473 = vld [vmem:[%s367 + $0xd0] sm:$0xff]
        %v474 = vld [vmem:[%s367 + $0xd8] sm:$0xff]
        %v475 = vld [vmem:[%s367 + $0xe0] sm:$0xff]
        %v476 = vld [vmem:[%s367 + $0xe8] sm:$0xff]
        %v477 = vld [vmem:[%s367 + $0xf0] sm:$0xff]
        %v478 = vld [vmem:[%s367 + $0xf8] sm:$0xff]
        %v479 = vpack.c.bf16 %v449, %v447
        %v480 = vpack.c.bf16 %v450, %v448
        %v481 = vpack.c.bf16 %v453, %v451
        %v482 = vpack.c.bf16 %v454, %v452
        %v483 = vpack.c.bf16 %v457, %v455
        %v484 = vpack.c.bf16 %v458, %v456
        %v485 = vpack.c.bf16 %v461, %v459
        %v486 = vpack.c.bf16 %v462, %v460
        %v487 = vpack.c.bf16 %v465, %v463
        %v488 = vpack.c.bf16 %v466, %v464
        %v489 = vpack.c.bf16 %v469, %v467
        %v490 = vpack.c.bf16 %v470, %v468
        %v491 = vpack.c.bf16 %v473, %v471
        %v492 = vpack.c.bf16 %v474, %v472
        %v493 = vpack.c.bf16 %v477, %v475
        %v494 = vpack.c.bf16 %v478, %v476
        %v495 = vld [vmem:[#allocation5] sm:$0xf]
        %v496 = vld [vmem:[#allocation5 + $0x4] sm:$0xf]
        %v497 = vld [vmem:[#allocation5 + $0x8] sm:$0xf]
        %v498 = vld [vmem:[#allocation5 + $0xc] sm:$0xf]
        %v499 = vld [vmem:[#allocation5 + $0x10] sm:$0xf]
        %v500 = vld [vmem:[#allocation5 + $0x14] sm:$0xf]
        %v501 = vld [vmem:[#allocation5 + $0x18] sm:$0xf]
        %v502 = vld [vmem:[#allocation5 + $0x1c] sm:$0xf]
        %v503 = vld [vmem:[#allocation5 + $0x20] sm:$0xf]
        %v504 = vld [vmem:[#allocation5 + $0x24] sm:$0xf]
        %v505 = vld [vmem:[#allocation5 + $0x28] sm:$0xf]
        %v506 = vld [vmem:[#allocation5 + $0x2c] sm:$0xf]
        %v507 = vld [vmem:[#allocation5 + $0x30] sm:$0xf]
        %v508 = vld [vmem:[#allocation5 + $0x34] sm:$0xf]
        %v509 = vld [vmem:[#allocation5 + $0x38] sm:$0xf]
        %v510 = vld [vmem:[#allocation5 + $0x3c] sm:$0xf]
        %v511 = vld [vmem:[#allocation5 + $0x40] sm:$0xf]
        %v512 = vld [vmem:[#allocation5 + $0x44] sm:$0xf]
        %v513 = vld [vmem:[#allocation5 + $0x48] sm:$0xf]
        %v514 = vld [vmem:[#allocation5 + $0x4c] sm:$0xf]
        %v515 = vld [vmem:[#allocation5 + $0x50] sm:$0xf]
        %v516 = vld [vmem:[#allocation5 + $0x54] sm:$0xf]
        %v517 = vld [vmem:[#allocation5 + $0x58] sm:$0xf]
        %v518 = vld [vmem:[#allocation5 + $0x5c] sm:$0xf]
        %v519 = vld [vmem:[#allocation5 + $0x60] sm:$0xf]
        %v520 = vld [vmem:[#allocation5 + $0x64] sm:$0xf]
        %v521 = vld [vmem:[#allocation5 + $0x68] sm:$0xf]
        %v522 = vld [vmem:[#allocation5 + $0x6c] sm:$0xf]
        %v523 = vld [vmem:[#allocation5 + $0x70] sm:$0xf]
        %v524 = vld [vmem:[#allocation5 + $0x74] sm:$0xf]
        %v525 = vld [vmem:[#allocation5 + $0x78] sm:$0xf]
        %v526 = vld [vmem:[#allocation5 + $0x7c] sm:$0xf]
        %v527 = vld [vmem:[%s2] sm:$0x1]
        %v529 = vperm.slane %v527, 0
        %v563 = vunpack.c.l.b16 %v495
        %v564 = vunpack.c.l.b16 %v496
        %v565 = vunpack.c.l.b16 %v497
        %v566 = vunpack.c.l.b16 %v498
        %v567 = vunpack.c.l.b16 %v499
        %v568 = vunpack.c.l.b16 %v500
        %v569 = vunpack.c.l.b16 %v501
        %v570 = vunpack.c.l.b16 %v502
        %v571 = vunpack.c.l.b16 %v503
        %v572 = vunpack.c.l.b16 %v504
        %v573 = vunpack.c.l.b16 %v505
        %v574 = vunpack.c.l.b16 %v506
        %v575 = vunpack.c.l.b16 %v507
        %v576 = vunpack.c.l.b16 %v508
        %v577 = vunpack.c.l.b16 %v509
        %v578 = vunpack.c.l.b16 %v510
        %v579 = vunpack.c.l.b16 %v511
        %v580 = vunpack.c.l.b16 %v512
        %v581 = vunpack.c.l.b16 %v513
        %v582 = vunpack.c.l.b16 %v514
        %v583 = vunpack.c.l.b16 %v515
        %v584 = vunpack.c.l.b16 %v516
        %v585 = vunpack.c.l.b16 %v517
        %v586 = vunpack.c.l.b16 %v518
        %v587 = vunpack.c.l.b16 %v519
        %v588 = vunpack.c.l.b16 %v520
        %v589 = vunpack.c.l.b16 %v521
        %v590 = vunpack.c.l.b16 %v522
        %v591 = vunpack.c.l.b16 %v523
        %v592 = vunpack.c.l.b16 %v524
        %v593 = vunpack.c.l.b16 %v525
        %v594 = vunpack.c.l.b16 %v526
        %v595 = vpack.c.b16 %v564, %v563
        %v596 = vpack.c.b16 %v566, %v565
        %v597 = vpack.c.b16 %v568, %v567
        %v598 = vpack.c.b16 %v570, %v569
        %v599 = vpack.c.b16 %v572, %v571
        %v600 = vpack.c.b16 %v574, %v573
        %v601 = vpack.c.b16 %v576, %v575
        %v602 = vpack.c.b16 %v578, %v577
        %v603 = vpack.c.b16 %v580, %v579
        %v604 = vpack.c.b16 %v582, %v581
        %v605 = vpack.c.b16 %v584, %v583
        %v606 = vpack.c.b16 %v586, %v585
        %v607 = vpack.c.b16 %v588, %v587
        %v608 = vpack.c.b16 %v590, %v589
        %v609 = vpack.c.b16 %v592, %v591
        %v610 = vpack.c.b16 %v594, %v593
        %627 = vmatpush.bf16.msra.mxu0 %v602
        %628 = vmatpush.bf16.msra.mxu0 %v601
        %629 = vmatpush.bf16.msra.mxu0 %v600
        %630 = vmatpush.bf16.msra.mxu0 %v599
        %631 = vmatpush.bf16.msra.mxu0 %v598
        %632 = vmatpush.bf16.msra.mxu0 %v597
        %633 = vmatpush.bf16.msra.mxu0 %v596
        %634 = vmatpush.bf16.msra.mxu0 %v595
        %635 = vmatmul.bf16.gmra.mxu0 %v479
        %v636 = vpop.f32.mrf.mxu0
        %v637 = vadd.f32 %v529, %v636
        %v638 = vpop.f32.mrf.mxu0
        %v639 = vadd.f32 %v529, %v638
        %640 = vmatmul.bf16.gmra.mxu0 %v481
        %v641 = vpop.f32.mrf.mxu0
        %v642 = vadd.f32 %v529, %v641
        %v643 = vpop.f32.mrf.mxu0
        %v644 = vadd.f32 %v529, %v643
        %645 = vmatmul.bf16.gmra.mxu0 %v483
        %v646 = vpop.f32.mrf.mxu0
        %v647 = vadd.f32 %v529, %v646
        %v648 = vpop.f32.mrf.mxu0
        %v649 = vadd.f32 %v529, %v648
        %650 = vmatmul.bf16.gmra.mxu0 %v485
        %v651 = vpop.f32.mrf.mxu0
        %v652 = vadd.f32 %v529, %v651
        %v653 = vpop.f32.mrf.mxu0
        %v654 = vadd.f32 %v529, %v653
        %655 = vmatmul.bf16.gmra.mxu0 %v487
        %v656 = vpop.f32.mrf.mxu0
        %v657 = vadd.f32 %v529, %v656
        %v658 = vpop.f32.mrf.mxu0
        %v659 = vadd.f32 %v529, %v658
        %660 = vmatmul.bf16.gmra.mxu0 %v489
        %v661 = vpop.f32.mrf.mxu0
        %v662 = vadd.f32 %v529, %v661
        %v663 = vpop.f32.mrf.mxu0
        %v664 = vadd.f32 %v529, %v663
        %665 = vmatmul.bf16.gmra.mxu0 %v491
        %v666 = vpop.f32.mrf.mxu0
        %v667 = vadd.f32 %v529, %v666
        %v668 = vpop.f32.mrf.mxu0
        %v669 = vadd.f32 %v529, %v668
        %670 = vmatmul.bf16.gmra.mxu0 %v493
        %v671 = vpop.f32.mrf.mxu0
        %v672 = vadd.f32 %v529, %v671
        %v673 = vpop.f32.mrf.mxu0
        %v674 = vadd.f32 %v529, %v673
        %675 = vdwg.mxu0
        %676 = vmatpush.bf16.msra.mxu0 %v610
        %677 = vmatpush.bf16.msra.mxu0 %v609
        %678 = vmatpush.bf16.msra.mxu0 %v608
        %679 = vmatpush.bf16.msra.mxu0 %v607
        %680 = vmatpush.bf16.msra.mxu0 %v606
        %681 = vmatpush.bf16.msra.mxu0 %v605
        %682 = vmatpush.bf16.msra.mxu0 %v604
        %683 = vmatpush.bf16.msra.mxu0 %v603
        %684 = vmatmul.bf16.gmra.mxu0 %v480
        %v685 = vpop.f32.mrf.mxu0
        %v686 = vadd.f32 %v637, %v685
        %v687 = vpop.f32.mrf.mxu0
        %v688 = vadd.f32 %v639, %v687
        %689 = vmatmul.bf16.gmra.mxu0 %v482
        %v690 = vpop.f32.mrf.mxu0
        %v691 = vadd.f32 %v642, %v690
        %v692 = vpop.f32.mrf.mxu0
        %v693 = vadd.f32 %v644, %v692
        %694 = vmatmul.bf16.gmra.mxu0 %v484
        %v695 = vpop.f32.mrf.mxu0
        %v696 = vadd.f32 %v647, %v695
        %v697 = vpop.f32.mrf.mxu0
        %v698 = vadd.f32 %v649, %v697
        %699 = vmatmul.bf16.gmra.mxu0 %v486
        %v700 = vpop.f32.mrf.mxu0
        %v701 = vadd.f32 %v652, %v700
        %v702 = vpop.f32.mrf.mxu0
        %v703 = vadd.f32 %v654, %v702
        %704 = vmatmul.bf16.gmra.mxu0 %v488
        %v705 = vpop.f32.mrf.mxu0
        %v706 = vadd.f32 %v657, %v705
        %v707 = vpop.f32.mrf.mxu0
        %v708 = vadd.f32 %v659, %v707
        %709 = vmatmul.bf16.gmra.mxu0 %v490
        %v710 = vpop.f32.mrf.mxu0
        %v711 = vadd.f32 %v662, %v710
        %v712 = vpop.f32.mrf.mxu0
        %v713 = vadd.f32 %v664, %v712
        %714 = vmatmul.bf16.gmra.mxu0 %v492
        %v715 = vpop.f32.mrf.mxu0
        %v716 = vadd.f32 %v667, %v715
        %v717 = vpop.f32.mrf.mxu0
        %v718 = vadd.f32 %v669, %v717
        %719 = vmatmul.bf16.gmra.mxu0 %v494
        %v720 = vpop.f32.mrf.mxu0
        %v721 = vadd.f32 %v672, %v720
        %v722 = vpop.f32.mrf.mxu0
        %v723 = vadd.f32 %v674, %v722
        %724 = vdwg.mxu0
        %v725 = vmax.f32 %v686, 0.0
        %v726 = vmax.f32 %v688, 0.0
        %v727 = vmax.f32 %v691, 0.0
        %v728 = vmax.f32 %v693, 0.0
        %v729 = vmax.f32 %v696, 0.0
        %v730 = vmax.f32 %v698, 0.0
        %v731 = vmax.f32 %v701, 0.0
        %v732 = vmax.f32 %v703, 0.0
        %v733 = vmax.f32 %v706, 0.0
        %v734 = vmax.f32 %v708, 0.0
        %v735 = vmax.f32 %v711, 0.0
        %v736 = vmax.f32 %v713, 0.0
        %v737 = vmax.f32 %v716, 0.0
        %v738 = vmax.f32 %v718, 0.0
        %v739 = vmax.f32 %v721, 0.0
        %v740 = vmax.f32 %v723, 0.0
        %v741 = vpack.c.bf16 %v726, %v725
        %v742 = vpack.c.bf16 %v728, %v727
        %v743 = vpack.c.bf16 %v730, %v729
        %v744 = vpack.c.bf16 %v732, %v731
        %v745 = vpack.c.bf16 %v734, %v733
        %v746 = vpack.c.bf16 %v736, %v735
        %v747 = vpack.c.bf16 %v738, %v737
        %v748 = vpack.c.bf16 %v740, %v739
        %v749 = vld [vmem:[#allocation7] sm:$0xf]
        %v750 = vld [vmem:[#allocation7 + $0x4] sm:$0xf]
        %v751 = vld [vmem:[#allocation7 + $0x8] sm:$0xf]
        %v752 = vld [vmem:[#allocation7 + $0xc] sm:$0xf]
        %v753 = vld [vmem:[#allocation7 + $0x10] sm:$0xf]
        %v754 = vld [vmem:[#allocation7 + $0x14] sm:$0xf]
        %v755 = vld [vmem:[#allocation7 + $0x18] sm:$0xf]
        %v756 = vld [vmem:[#allocation7 + $0x1c] sm:$0xf]
        %v757 = vld [vmem:[#allocation7 + $0x20] sm:$0xf]
        %v758 = vld [vmem:[#allocation7 + $0x24] sm:$0xf]
        %v759 = vld [vmem:[#allocation7 + $0x28] sm:$0xf]
        %v760 = vld [vmem:[#allocation7 + $0x2c] sm:$0xf]
        %v761 = vld [vmem:[#allocation7 + $0x30] sm:$0xf]
        %v762 = vld [vmem:[#allocation7 + $0x34] sm:$0xf]
        %v763 = vld [vmem:[#allocation7 + $0x38] sm:$0xf]
        %v764 = vld [vmem:[#allocation7 + $0x3c] sm:$0xf]
        %v765 = vld [vmem:[%s4] sm:$0x1]
        %v767 = vperm.slane %v765, 0
        %v785 = vunpack.c.l.b16 %v749
        %v786 = vunpack.c.l.b16 %v750
        %v787 = vunpack.c.l.b16 %v751
        %v788 = vunpack.c.l.b16 %v752
        %v789 = vunpack.c.l.b16 %v753
        %v790 = vunpack.c.l.b16 %v754
        %v791 = vunpack.c.l.b16 %v755
        %v792 = vunpack.c.l.b16 %v756
        %v793 = vunpack.c.l.b16 %v757
        %v794 = vunpack.c.l.b16 %v758
        %v795 = vunpack.c.l.b16 %v759
        %v796 = vunpack.c.l.b16 %v760
        %v797 = vunpack.c.l.b16 %v761
        %v798 = vunpack.c.l.b16 %v762
        %v799 = vunpack.c.l.b16 %v763
        %v800 = vunpack.c.l.b16 %v764
        %v801 = vpack.c.b16 %v786, %v785
        %v802 = vpack.c.b16 %v788, %v787
        %v803 = vpack.c.b16 %v790, %v789
        %v804 = vpack.c.b16 %v792, %v791
        %v805 = vpack.c.b16 %v794, %v793
        %v806 = vpack.c.b16 %v796, %v795
        %v807 = vpack.c.b16 %v798, %v797
        %v808 = vpack.c.b16 %v800, %v799
        %817 = vmatpush.bf16.msra.mxu0 %v808
        %818 = vmatpush.bf16.msra.mxu0 %v807
        %819 = vmatpush.bf16.msra.mxu0 %v806
        %820 = vmatpush.bf16.msra.mxu0 %v805
        %821 = vmatpush.bf16.msra.mxu0 %v804
        %822 = vmatpush.bf16.msra.mxu0 %v803
        %823 = vmatpush.bf16.msra.mxu0 %v802
        %824 = vmatpush.bf16.msra.mxu0 %v801
        %825 = vmatmul.bf16.gmra.mxu0 %v741
        %v826 = vpop.f32.mrf.mxu0
        %v827 = vadd.f32 %v767, %v826
        %v828 = vpop.f32.mrf.mxu0
        %v829 = vadd.f32 %v767, %v828
        %830 = vmatmul.bf16.gmra.mxu0 %v742
        %v831 = vpop.f32.mrf.mxu0
        %v832 = vadd.f32 %v767, %v831
        %v833 = vpop.f32.mrf.mxu0
        %v834 = vadd.f32 %v767, %v833
        %835 = vmatmul.bf16.gmra.mxu0 %v743
        %v836 = vpop.f32.mrf.mxu0
        %v837 = vadd.f32 %v767, %v836
        %v838 = vpop.f32.mrf.mxu0
        %v839 = vadd.f32 %v767, %v838
        %840 = vmatmul.bf16.gmra.mxu0 %v744
        %v841 = vpop.f32.mrf.mxu0
        %v842 = vadd.f32 %v767, %v841
        %v843 = vpop.f32.mrf.mxu0
        %v844 = vadd.f32 %v767, %v843
        %845 = vmatmul.bf16.gmra.mxu0 %v745
        %v846 = vpop.f32.mrf.mxu0
        %v847 = vadd.f32 %v767, %v846
        %v848 = vpop.f32.mrf.mxu0
        %v849 = vadd.f32 %v767, %v848
        %850 = vmatmul.bf16.gmra.mxu0 %v746
        %v851 = vpop.f32.mrf.mxu0
        %v852 = vadd.f32 %v767, %v851
        %v853 = vpop.f32.mrf.mxu0
        %v854 = vadd.f32 %v767, %v853
        %855 = vmatmul.bf16.gmra.mxu0 %v747
        %v856 = vpop.f32.mrf.mxu0
        %v857 = vadd.f32 %v767, %v856
        %v858 = vpop.f32.mrf.mxu0
        %v859 = vadd.f32 %v767, %v858
        %860 = vmatmul.bf16.gmra.mxu0 %v748
        %v861 = vpop.f32.mrf.mxu0
        %v862 = vadd.f32 %v767, %v861
        %v863 = vpop.f32.mrf.mxu0
        %v864 = vadd.f32 %v767, %v863
        %865 = vdwg.mxu0
        %v866 = vmax.f32 %v827, 0.0
        %v867 = vmax.f32 %v829, 0.0
        %v868 = vmax.f32 %v832, 0.0
        %v869 = vmax.f32 %v834, 0.0
        %v870 = vmax.f32 %v837, 0.0
        %v871 = vmax.f32 %v839, 0.0
        %v872 = vmax.f32 %v842, 0.0
        %v873 = vmax.f32 %v844, 0.0
        %v874 = vmax.f32 %v847, 0.0
        %v875 = vmax.f32 %v849, 0.0
        %v876 = vmax.f32 %v852, 0.0
        %v877 = vmax.f32 %v854, 0.0
        %v878 = vmax.f32 %v857, 0.0
        %v879 = vmax.f32 %v859, 0.0
        %v880 = vmax.f32 %v862, 0.0
        %v881 = vmax.f32 %v864, 0.0
        %v882 = vpack.c.bf16 %v867, %v866
        %v883 = vpack.c.bf16 %v869, %v868
        %v884 = vpack.c.bf16 %v871, %v870
        %v885 = vpack.c.bf16 %v873, %v872
        %v886 = vpack.c.bf16 %v875, %v874
        %v887 = vpack.c.bf16 %v877, %v876
        %v888 = vpack.c.bf16 %v879, %v878
        %v889 = vpack.c.bf16 %v881, %v880
        %v890 = vld [vmem:[#allocation8] sm:$0xf]
        %v891 = vld [vmem:[#allocation8 + $0x4] sm:$0xf]
        %v892 = vld [vmem:[#allocation8 + $0x8] sm:$0xf]
        %v893 = vld [vmem:[#allocation8 + $0xc] sm:$0xf]
        %v894 = vld [vmem:[#allocation8 + $0x10] sm:$0xf]
        %v895 = vld [vmem:[#allocation8 + $0x14] sm:$0xf]
        %v896 = vld [vmem:[#allocation8 + $0x18] sm:$0xf]
        %v897 = vld [vmem:[#allocation8 + $0x1c] sm:$0xf]
        %v898 = vld [vmem:[#allocation8 + $0x20] sm:$0xf]
        %v899 = vld [vmem:[#allocation8 + $0x24] sm:$0xf]
        %v900 = vld [vmem:[#allocation8 + $0x28] sm:$0xf]
        %v901 = vld [vmem:[#allocation8 + $0x2c] sm:$0xf]
        %v902 = vld [vmem:[#allocation8 + $0x30] sm:$0xf]
        %v903 = vld [vmem:[#allocation8 + $0x34] sm:$0xf]
        %v904 = vld [vmem:[#allocation8 + $0x38] sm:$0xf]
        %v905 = vld [vmem:[#allocation8 + $0x3c] sm:$0xf]
        %v906 = vld [vmem:[%s6] sm:$0x1]
        %v908 = vperm.slane %v906, 0
        %v926 = vunpack.c.l.b16 %v890
        %v927 = vunpack.c.l.b16 %v891
        %v928 = vunpack.c.l.b16 %v892
        %v929 = vunpack.c.l.b16 %v893
        %v930 = vunpack.c.l.b16 %v894
        %v931 = vunpack.c.l.b16 %v895
        %v932 = vunpack.c.l.b16 %v896
        %v933 = vunpack.c.l.b16 %v897
        %v934 = vunpack.c.l.b16 %v898
        %v935 = vunpack.c.l.b16 %v899
        %v936 = vunpack.c.l.b16 %v900
        %v937 = vunpack.c.l.b16 %v901
        %v938 = vunpack.c.l.b16 %v902
        %v939 = vunpack.c.l.b16 %v903
        %v940 = vunpack.c.l.b16 %v904
        %v941 = vunpack.c.l.b16 %v905
        %v942 = vpack.c.b16 %v927, %v926
        %v943 = vpack.c.b16 %v929, %v928
        %v944 = vpack.c.b16 %v931, %v930
        %v945 = vpack.c.b16 %v933, %v932
        %v946 = vpack.c.b16 %v935, %v934
        %v947 = vpack.c.b16 %v937, %v936
        %v948 = vpack.c.b16 %v939, %v938
        %v949 = vpack.c.b16 %v941, %v940
        %958 = vmatpush.bf16.msra.mxu0 %v949
        %959 = vmatpush.bf16.msra.mxu0 %v948
        %960 = vmatpush.bf16.msra.mxu0 %v947
        %961 = vmatpush.bf16.msra.mxu0 %v946
        %962 = vmatpush.bf16.msra.mxu0 %v945
        %963 = vmatpush.bf16.msra.mxu0 %v944
        %964 = vmatpush.bf16.msra.mxu0 %v943
        %965 = vmatpush.bf16.msra.mxu0 %v942
        %966 = vmatmul.bf16.gmra.mxu0 %v882
        %v967 = vpop.f32.mrf.mxu0
        %v968 = vadd.f32 %v908, %v967
        %v969 = vpop.f32.mrf.mxu0
        %v970 = vadd.f32 %v908, %v969
        %971 = vmatmul.bf16.gmra.mxu0 %v883
        %v972 = vpop.f32.mrf.mxu0
        %v973 = vadd.f32 %v908, %v972
        %v974 = vpop.f32.mrf.mxu0
        %v975 = vadd.f32 %v908, %v974
        %976 = vmatmul.bf16.gmra.mxu0 %v884
        %v977 = vpop.f32.mrf.mxu0
        %v978 = vadd.f32 %v908, %v977
        %v979 = vpop.f32.mrf.mxu0
        %v980 = vadd.f32 %v908, %v979
        %981 = vmatmul.bf16.gmra.mxu0 %v885
        %v982 = vpop.f32.mrf.mxu0
        %v983 = vadd.f32 %v908, %v982
        %v984 = vpop.f32.mrf.mxu0
        %v985 = vadd.f32 %v908, %v984
        %986 = vmatmul.bf16.gmra.mxu0 %v886
        %v987 = vpop.f32.mrf.mxu0
        %v988 = vadd.f32 %v908, %v987
        %v989 = vpop.f32.mrf.mxu0
        %v990 = vadd.f32 %v908, %v989
        %991 = vmatmul.bf16.gmra.mxu0 %v887
        %v992 = vpop.f32.mrf.mxu0
        %v993 = vadd.f32 %v908, %v992
        %v994 = vpop.f32.mrf.mxu0
        %v995 = vadd.f32 %v908, %v994
        %996 = vmatmul.bf16.gmra.mxu0 %v888
        %v997 = vpop.f32.mrf.mxu0
        %v998 = vadd.f32 %v908, %v997
        %v999 = vpop.f32.mrf.mxu0
        %v1000 = vadd.f32 %v908, %v999
        %1001 = vmatmul.bf16.gmra.mxu0 %v889
        %v1002 = vpop.f32.mrf.mxu0
        %v1003 = vadd.f32 %v908, %v1002
        %v1004 = vpop.f32.mrf.mxu0
        %v1005 = vadd.f32 %v908, %v1004
        %1006 = vdwg.mxu0
        %v1007 = vld [vmem:[%s392] sm:$0x3]
        %v1008 = vld [vmem:[%s392 + $0x2] sm:$0x3]
        %v1009 = vld [vmem:[%s392 + $0x4] sm:$0x3]
        %v1010 = vld [vmem:[%s392 + $0x6] sm:$0x3]
        %v1011 = vld [vmem:[%s392 + $0x8] sm:$0x3]
        %v1012 = vld [vmem:[%s392 + $0xa] sm:$0x3]
        %v1013 = vld [vmem:[%s392 + $0xc] sm:$0x3]
        %v1014 = vld [vmem:[%s392 + $0xe] sm:$0x3]
        %v1015 = vld [vmem:[%s392 + $0x10] sm:$0x3]
        %v1016 = vld [vmem:[%s392 + $0x12] sm:$0x3]
        %v1017 = vld [vmem:[%s392 + $0x14] sm:$0x3]
        %v1018 = vld [vmem:[%s392 + $0x16] sm:$0x3]
        %v1019 = vld [vmem:[%s392 + $0x18] sm:$0x3]
        %v1020 = vld [vmem:[%s392 + $0x1a] sm:$0x3]
        %v1021 = vld [vmem:[%s392 + $0x1c] sm:$0x3]
        %v1022 = vld [vmem:[%s392 + $0x1e] sm:$0x3]
        %v1023 = vunpack.c.0.s8 %v1007
        %v1024 = vunpack.c.0.s8 %v1008
        %v1025 = vunpack.c.0.s8 %v1009
        %v1026 = vunpack.c.0.s8 %v1010
        %v1027 = vunpack.c.0.s8 %v1011
        %v1028 = vunpack.c.0.s8 %v1012
        %v1029 = vunpack.c.0.s8 %v1013
        %v1030 = vunpack.c.0.s8 %v1014
        %v1031 = vunpack.c.0.s8 %v1015
        %v1032 = vunpack.c.0.s8 %v1016
        %v1033 = vunpack.c.0.s8 %v1017
        %v1034 = vunpack.c.0.s8 %v1018
        %v1035 = vunpack.c.0.s8 %v1019
        %v1036 = vunpack.c.0.s8 %v1020
        %v1037 = vunpack.c.0.s8 %v1021
        %v1038 = vunpack.c.0.s8 %v1022
        %v1039 = vcvt.s32.f32 %v1023
        %v1040 = vcvt.s32.f32 %v1024
        %v1041 = vcvt.s32.f32 %v1025
        %v1042 = vcvt.s32.f32 %v1026
        %v1043 = vcvt.s32.f32 %v1027
        %v1044 = vcvt.s32.f32 %v1028
        %v1045 = vcvt.s32.f32 %v1029
        %v1046 = vcvt.s32.f32 %v1030
        %v1047 = vcvt.s32.f32 %v1031
        %v1048 = vcvt.s32.f32 %v1032
        %v1049 = vcvt.s32.f32 %v1033
        %v1050 = vcvt.s32.f32 %v1034
        %v1051 = vcvt.s32.f32 %v1035
        %v1052 = vcvt.s32.f32 %v1036
        %v1053 = vcvt.s32.f32 %v1037
        %v1054 = vcvt.s32.f32 %v1038
        %v1055 = vsub.f32 %v1039, 1.0
        %v1056 = vsub.f32 %v1040, 1.0
        %v1057 = vsub.f32 %v1041, 1.0
        %v1058 = vsub.f32 %v1042, 1.0
        %v1059 = vsub.f32 %v1043, 1.0
        %v1060 = vsub.f32 %v1044, 1.0
        %v1061 = vsub.f32 %v1045, 1.0
        %v1062 = vsub.f32 %v1046, 1.0
        %v1063 = vsub.f32 %v1047, 1.0
        %v1064 = vsub.f32 %v1048, 1.0
        %v1065 = vsub.f32 %v1049, 1.0
        %v1066 = vsub.f32 %v1050, 1.0
        %v1067 = vsub.f32 %v1051, 1.0
        %v1068 = vsub.f32 %v1052, 1.0
        %v1069 = vsub.f32 %v1053, 1.0
        %v1070 = vsub.f32 %v1054, 1.0
        %v1071 = vmul.f32 %v1055, 1e+09
        %v1072 = vmul.f32 %v1056, 1e+09
        %v1073 = vmul.f32 %v1057, 1e+09
        %v1074 = vmul.f32 %v1058, 1e+09
        %v1075 = vmul.f32 %v1059, 1e+09
        %v1076 = vmul.f32 %v1060, 1e+09
        %v1077 = vmul.f32 %v1061, 1e+09
        %v1078 = vmul.f32 %v1062, 1e+09
        %v1079 = vmul.f32 %v1063, 1e+09
        %v1080 = vmul.f32 %v1064, 1e+09
        %v1081 = vmul.f32 %v1065, 1e+09
        %v1082 = vmul.f32 %v1066, 1e+09
        %v1083 = vmul.f32 %v1067, 1e+09
        %v1084 = vmul.f32 %v1068, 1e+09
        %v1085 = vmul.f32 %v1069, 1e+09
        %v1086 = vmul.f32 %v1070, 1e+09
        %v1087 = vadd.f32 %v968, %v1071
        %v1088 = vadd.f32 %v970, %v1072
        %v1089 = vadd.f32 %v973, %v1073
        %v1090 = vadd.f32 %v975, %v1074
        %v1091 = vadd.f32 %v978, %v1075
        %v1092 = vadd.f32 %v980, %v1076
        %v1093 = vadd.f32 %v983, %v1077
        %v1094 = vadd.f32 %v985, %v1078
        %v1095 = vadd.f32 %v988, %v1079
        %v1096 = vadd.f32 %v990, %v1080
        %v1097 = vadd.f32 %v993, %v1081
        %v1098 = vadd.f32 %v995, %v1082
        %v1099 = vadd.f32 %v998, %v1083
        %v1100 = vadd.f32 %v1000, %v1084
        %v1101 = vadd.f32 %v1003, %v1085
        %v1102 = vadd.f32 %v1005, %v1086
        %1103 = vmax.xlane.f32.xlu0 %v1087
        %v1104 = vpop.xlane.xlu0 %1103
        %1105 = vmax.xlane.f32.xlu0 %v1088
        %v1106 = vpop.xlane.xlu0 %1105
        %1107 = vmax.xlane.f32.xlu0 %v1089
        %v1108 = vpop.xlane.xlu0 %1107
        %1109 = vmax.xlane.f32.xlu0 %v1090
        %v1110 = vpop.xlane.xlu0 %1109
        %1111 = vmax.xlane.f32.xlu0 %v1091
        %v1112 = vpop.xlane.xlu0 %1111
        %1113 = vmax.xlane.f32.xlu0 %v1092
        %v1114 = vpop.xlane.xlu0 %1113
        %1115 = vmax.xlane.f32.xlu0 %v1093
        %v1116 = vpop.xlane.xlu0 %1115
        %1117 = vmax.xlane.f32.xlu0 %v1094
        %v1118 = vpop.xlane.xlu0 %1117
        %1119 = vmax.xlane.f32.xlu0 %v1095
        %v1120 = vpop.xlane.xlu0 %1119
        %1121 = vmax.xlane.f32.xlu0 %v1096
        %v1122 = vpop.xlane.xlu0 %1121
        %1123 = vmax.xlane.f32.xlu0 %v1097
        %v1124 = vpop.xlane.xlu0 %1123
        %1125 = vmax.xlane.f32.xlu0 %v1098
        %v1126 = vpop.xlane.xlu0 %1125
        %1127 = vmax.xlane.f32.xlu0 %v1099
        %v1128 = vpop.xlane.xlu0 %1127
        %1129 = vmax.xlane.f32.xlu0 %v1100
        %v1130 = vpop.xlane.xlu0 %1129
        %1131 = vmax.xlane.f32.xlu0 %v1101
        %v1132 = vpop.xlane.xlu0 %1131
        %1133 = vmax.xlane.f32.xlu0 %v1102
        %v1134 = vpop.xlane.xlu0 %1133
        %v1135 = vsub.f32 %v1087, %v1104
        %v1136 = vsub.f32 %v1088, %v1106
        %v1137 = vsub.f32 %v1089, %v1108
        %v1138 = vsub.f32 %v1090, %v1110
        %v1139 = vsub.f32 %v1091, %v1112
        %v1140 = vsub.f32 %v1092, %v1114
        %v1141 = vsub.f32 %v1093, %v1116
        %v1142 = vsub.f32 %v1094, %v1118
        %v1143 = vsub.f32 %v1095, %v1120
        %v1144 = vsub.f32 %v1096, %v1122
        %v1145 = vsub.f32 %v1097, %v1124
        %v1146 = vsub.f32 %v1098, %v1126
        %v1147 = vsub.f32 %v1099, %v1128
        %v1148 = vsub.f32 %v1100, %v1130
        %v1149 = vsub.f32 %v1101, %v1132
        %v1150 = vsub.f32 %v1102, %v1134
        %v1151 = vmul.f32 %v1135, 1.442695
        %v1152 = vpow.pop %v1151
        %v1153 = vmul.f32 %v1136, 1.442695
        %v1154 = vpow.pop %v1153
        %v1155 = vmul.f32 %v1137, 1.442695
        %v1156 = vpow.pop %v1155
        %v1157 = vmul.f32 %v1138, 1.442695
        %v1158 = vpow.pop %v1157
        %v1159 = vmul.f32 %v1139, 1.442695
        %v1160 = vpow.pop %v1159
        %v1161 = vmul.f32 %v1140, 1.442695
        %v1162 = vpow.pop %v1161
        %v1163 = vmul.f32 %v1141, 1.442695
        %v1164 = vpow.pop %v1163
        %v1165 = vmul.f32 %v1142, 1.442695
        %v1166 = vpow.pop %v1165
        %v1167 = vmul.f32 %v1143, 1.442695
        %v1168 = vpow.pop %v1167
        %v1169 = vmul.f32 %v1144, 1.442695
        %v1170 = vpow.pop %v1169
        %v1171 = vmul.f32 %v1145, 1.442695
        %v1172 = vpow.pop %v1171
        %v1173 = vmul.f32 %v1146, 1.442695
        %v1174 = vpow.pop %v1173
        %v1175 = vmul.f32 %v1147, 1.442695
        %v1176 = vpow.pop %v1175
        %v1177 = vmul.f32 %v1148, 1.442695
        %v1178 = vpow.pop %v1177
        %v1179 = vmul.f32 %v1149, 1.442695
        %v1180 = vpow.pop %v1179
        %v1181 = vmul.f32 %v1150, 1.442695
        %v1182 = vpow.pop %v1181
        %1183 = vadd.xlane.f32.xlu0 %v1152
        %v1184 = vpop.xlane.xlu0 %1183
        %1185 = vadd.xlane.f32.xlu0 %v1154
        %v1186 = vpop.xlane.xlu0 %1185
        %1187 = vadd.xlane.f32.xlu0 %v1156
        %v1188 = vpop.xlane.xlu0 %1187
        %1189 = vadd.xlane.f32.xlu0 %v1158
        %v1190 = vpop.xlane.xlu0 %1189
        %1191 = vadd.xlane.f32.xlu0 %v1160
        %v1192 = vpop.xlane.xlu0 %1191
        %1193 = vadd.xlane.f32.xlu0 %v1162
        %v1194 = vpop.xlane.xlu0 %1193
        %1195 = vadd.xlane.f32.xlu0 %v1164
        %v1196 = vpop.xlane.xlu0 %1195
        %1197 = vadd.xlane.f32.xlu0 %v1166
        %v1198 = vpop.xlane.xlu0 %1197
        %1199 = vadd.xlane.f32.xlu0 %v1168
        %v1200 = vpop.xlane.xlu0 %1199
        %1201 = vadd.xlane.f32.xlu0 %v1170
        %v1202 = vpop.xlane.xlu0 %1201
        %1203 = vadd.xlane.f32.xlu0 %v1172
        %v1204 = vpop.xlane.xlu0 %1203
        %1205 = vadd.xlane.f32.xlu0 %v1174
        %v1206 = vpop.xlane.xlu0 %1205
        %1207 = vadd.xlane.f32.xlu0 %v1176
        %v1208 = vpop.xlane.xlu0 %1207
        %1209 = vadd.xlane.f32.xlu0 %v1178
        %v1210 = vpop.xlane.xlu0 %1209
        %1211 = vadd.xlane.f32.xlu0 %v1180
        %v1212 = vpop.xlane.xlu0 %1211
        %1213 = vadd.xlane.f32.xlu0 %v1182
        %v1214 = vpop.xlane.xlu0 %1213
        %v1215 = vrcp.pop %v1184
        %v1216 = vmul.f32 %v1184, %v1215
        %v1217 = vsub.f32 1.0, %v1216
        %v1218 = vmul.f32 %v1215, %v1217
        %v1219 = vadd.f32 %v1215, %v1218
        %vm1220 = vweird.f32 %v1184
        %vm1221 = vweird.f32 %v1215
        %vm1222 = vmor %vm1220, %vm1221
        %v1223 = vsel %vm1222, %v1215, %v1219
        %v1224 = vand.u32 2147483647, %v1184
        %vm1225 = vcmp.eq.f32.partialorder %v1224, 8.507059e+37
        %v1226 = vand.u32 %v1184, 2147483648
        %v1227 = vor.u32 1.1754944e-38, %v1226
        %v1228 = vsel %vm1225, %v1227, %v1223
        %v1229 = vrcp.pop %v1186
        %v1230 = vmul.f32 %v1186, %v1229
        %v1231 = vsub.f32 1.0, %v1230
        %v1232 = vmul.f32 %v1229, %v1231
        %v1233 = vadd.f32 %v1229, %v1232
        %vm1234 = vweird.f32 %v1186
        %vm1235 = vweird.f32 %v1229
        %vm1236 = vmor %vm1234, %vm1235
        %v1237 = vsel %vm1236, %v1229, %v1233
        %v1238 = vand.u32 2147483647, %v1186
        %vm1239 = vcmp.eq.f32.partialorder %v1238, 8.507059e+37
        %v1240 = vand.u32 %v1186, 2147483648
        %v1241 = vor.u32 1.1754944e-38, %v1240
        %v1242 = vsel %vm1239, %v1241, %v1237
        %v1243 = vrcp.pop %v1188
        %v1244 = vmul.f32 %v1188, %v1243
        %v1245 = vsub.f32 1.0, %v1244
        %v1246 = vmul.f32 %v1243, %v1245
        %v1247 = vadd.f32 %v1243, %v1246
        %vm1248 = vweird.f32 %v1188
        %vm1249 = vweird.f32 %v1243
        %vm1250 = vmor %vm1248, %vm1249
        %v1251 = vsel %vm1250, %v1243, %v1247
        %v1252 = vand.u32 2147483647, %v1188
        %vm1253 = vcmp.eq.f32.partialorder %v1252, 8.507059e+37
        %v1254 = vand.u32 %v1188, 2147483648
        %v1255 = vor.u32 1.1754944e-38, %v1254
        %v1256 = vsel %vm1253, %v1255, %v1251
        %v1257 = vrcp.pop %v1190
        %v1258 = vmul.f32 %v1190, %v1257
        %v1259 = vsub.f32 1.0, %v1258
        %v1260 = vmul.f32 %v1257, %v1259
        %v1261 = vadd.f32 %v1257, %v1260
        %vm1262 = vweird.f32 %v1190
        %vm1263 = vweird.f32 %v1257
        %vm1264 = vmor %vm1262, %vm1263
        %v1265 = vsel %vm1264, %v1257, %v1261
        %v1266 = vand.u32 2147483647, %v1190
        %vm1267 = vcmp.eq.f32.partialorder %v1266, 8.507059e+37
        %v1268 = vand.u32 %v1190, 2147483648
        %v1269 = vor.u32 1.1754944e-38, %v1268
        %v1270 = vsel %vm1267, %v1269, %v1265
        %v1271 = vrcp.pop %v1192
        %v1272 = vmul.f32 %v1192, %v1271
        %v1273 = vsub.f32 1.0, %v1272
        %v1274 = vmul.f32 %v1271, %v1273
        %v1275 = vadd.f32 %v1271, %v1274
        %vm1276 = vweird.f32 %v1192
        %vm1277 = vweird.f32 %v1271
        %vm1278 = vmor %vm1276, %vm1277
        %v1279 = vsel %vm1278, %v1271, %v1275
        %v1280 = vand.u32 2147483647, %v1192
        %vm1281 = vcmp.eq.f32.partialorder %v1280, 8.507059e+37
        %v1282 = vand.u32 %v1192, 2147483648
        %v1283 = vor.u32 1.1754944e-38, %v1282
        %v1284 = vsel %vm1281, %v1283, %v1279
        %v1285 = vrcp.pop %v1194
        %v1286 = vmul.f32 %v1194, %v1285
        %v1287 = vsub.f32 1.0, %v1286
        %v1288 = vmul.f32 %v1285, %v1287
        %v1289 = vadd.f32 %v1285, %v1288
        %vm1290 = vweird.f32 %v1194
        %vm1291 = vweird.f32 %v1285
        %vm1292 = vmor %vm1290, %vm1291
        %v1293 = vsel %vm1292, %v1285, %v1289
        %v1294 = vand.u32 2147483647, %v1194
        %vm1295 = vcmp.eq.f32.partialorder %v1294, 8.507059e+37
        %v1296 = vand.u32 %v1194, 2147483648
        %v1297 = vor.u32 1.1754944e-38, %v1296
        %v1298 = vsel %vm1295, %v1297, %v1293
        %v1299 = vrcp.pop %v1196
        %v1300 = vmul.f32 %v1196, %v1299
        %v1301 = vsub.f32 1.0, %v1300
        %v1302 = vmul.f32 %v1299, %v1301
        %v1303 = vadd.f32 %v1299, %v1302
        %vm1304 = vweird.f32 %v1196
        %vm1305 = vweird.f32 %v1299
        %vm1306 = vmor %vm1304, %vm1305
        %v1307 = vsel %vm1306, %v1299, %v1303
        %v1308 = vand.u32 2147483647, %v1196
        %vm1309 = vcmp.eq.f32.partialorder %v1308, 8.507059e+37
        %v1310 = vand.u32 %v1196, 2147483648
        %v1311 = vor.u32 1.1754944e-38, %v1310
        %v1312 = vsel %vm1309, %v1311, %v1307
        %v1313 = vrcp.pop %v1198
        %v1314 = vmul.f32 %v1198, %v1313
        %v1315 = vsub.f32 1.0, %v1314
        %v1316 = vmul.f32 %v1313, %v1315
        %v1317 = vadd.f32 %v1313, %v1316
        %vm1318 = vweird.f32 %v1198
        %vm1319 = vweird.f32 %v1313
        %vm1320 = vmor %vm1318, %vm1319
        %v1321 = vsel %vm1320, %v1313, %v1317
        %v1322 = vand.u32 2147483647, %v1198
        %vm1323 = vcmp.eq.f32.partialorder %v1322, 8.507059e+37
        %v1324 = vand.u32 %v1198, 2147483648
        %v1325 = vor.u32 1.1754944e-38, %v1324
        %v1326 = vsel %vm1323, %v1325, %v1321
        %v1327 = vrcp.pop %v1200
        %v1328 = vmul.f32 %v1200, %v1327
        %v1329 = vsub.f32 1.0, %v1328
        %v1330 = vmul.f32 %v1327, %v1329
        %v1331 = vadd.f32 %v1327, %v1330
        %vm1332 = vweird.f32 %v1200
        %vm1333 = vweird.f32 %v1327
        %vm1334 = vmor %vm1332, %vm1333
        %v1335 = vsel %vm1334, %v1327, %v1331
        %v1336 = vand.u32 2147483647, %v1200
        %vm1337 = vcmp.eq.f32.partialorder %v1336, 8.507059e+37
        %v1338 = vand.u32 %v1200, 2147483648
        %v1339 = vor.u32 1.1754944e-38, %v1338
        %v1340 = vsel %vm1337, %v1339, %v1335
        %v1341 = vrcp.pop %v1202
        %v1342 = vmul.f32 %v1202, %v1341
        %v1343 = vsub.f32 1.0, %v1342
        %v1344 = vmul.f32 %v1341, %v1343
        %v1345 = vadd.f32 %v1341, %v1344
        %vm1346 = vweird.f32 %v1202
        %vm1347 = vweird.f32 %v1341
        %vm1348 = vmor %vm1346, %vm1347
        %v1349 = vsel %vm1348, %v1341, %v1345
        %v1350 = vand.u32 2147483647, %v1202
        %vm1351 = vcmp.eq.f32.partialorder %v1350, 8.507059e+37
        %v1352 = vand.u32 %v1202, 2147483648
        %v1353 = vor.u32 1.1754944e-38, %v1352
        %v1354 = vsel %vm1351, %v1353, %v1349
        %v1355 = vrcp.pop %v1204
        %v1356 = vmul.f32 %v1204, %v1355
        %v1357 = vsub.f32 1.0, %v1356
        %v1358 = vmul.f32 %v1355, %v1357
        %v1359 = vadd.f32 %v1355, %v1358
        %vm1360 = vweird.f32 %v1204
        %vm1361 = vweird.f32 %v1355
        %vm1362 = vmor %vm1360, %vm1361
        %v1363 = vsel %vm1362, %v1355, %v1359
        %v1364 = vand.u32 2147483647, %v1204
        %vm1365 = vcmp.eq.f32.partialorder %v1364, 8.507059e+37
        %v1366 = vand.u32 %v1204, 2147483648
        %v1367 = vor.u32 1.1754944e-38, %v1366
        %v1368 = vsel %vm1365, %v1367, %v1363
        %v1369 = vrcp.pop %v1206
        %v1370 = vmul.f32 %v1206, %v1369
        %v1371 = vsub.f32 1.0, %v1370
        %v1372 = vmul.f32 %v1369, %v1371
        %v1373 = vadd.f32 %v1369, %v1372
        %vm1374 = vweird.f32 %v1206
        %vm1375 = vweird.f32 %v1369
        %vm1376 = vmor %vm1374, %vm1375
        %v1377 = vsel %vm1376, %v1369, %v1373
        %v1378 = vand.u32 2147483647, %v1206
        %vm1379 = vcmp.eq.f32.partialorder %v1378, 8.507059e+37
        %v1380 = vand.u32 %v1206, 2147483648
        %v1381 = vor.u32 1.1754944e-38, %v1380
        %v1382 = vsel %vm1379, %v1381, %v1377
        %v1383 = vrcp.pop %v1208
        %v1384 = vmul.f32 %v1208, %v1383
        %v1385 = vsub.f32 1.0, %v1384
        %v1386 = vmul.f32 %v1383, %v1385
        %v1387 = vadd.f32 %v1383, %v1386
        %vm1388 = vweird.f32 %v1208
        %vm1389 = vweird.f32 %v1383
        %vm1390 = vmor %vm1388, %vm1389
        %v1391 = vsel %vm1390, %v1383, %v1387
        %v1392 = vand.u32 2147483647, %v1208
        %vm1393 = vcmp.eq.f32.partialorder %v1392, 8.507059e+37
        %v1394 = vand.u32 %v1208, 2147483648
        %v1395 = vor.u32 1.1754944e-38, %v1394
        %v1396 = vsel %vm1393, %v1395, %v1391
        %v1397 = vrcp.pop %v1210
        %v1398 = vmul.f32 %v1210, %v1397
        %v1399 = vsub.f32 1.0, %v1398
        %v1400 = vmul.f32 %v1397, %v1399
        %v1401 = vadd.f32 %v1397, %v1400
        %vm1402 = vweird.f32 %v1210
        %vm1403 = vweird.f32 %v1397
        %vm1404 = vmor %vm1402, %vm1403
        %v1405 = vsel %vm1404, %v1397, %v1401
        %v1406 = vand.u32 2147483647, %v1210
        %vm1407 = vcmp.eq.f32.partialorder %v1406, 8.507059e+37
        %v1408 = vand.u32 %v1210, 2147483648
        %v1409 = vor.u32 1.1754944e-38, %v1408
        %v1410 = vsel %vm1407, %v1409, %v1405
        %v1411 = vrcp.pop %v1212
        %v1412 = vmul.f32 %v1212, %v1411
        %v1413 = vsub.f32 1.0, %v1412
        %v1414 = vmul.f32 %v1411, %v1413
        %v1415 = vadd.f32 %v1411, %v1414
        %vm1416 = vweird.f32 %v1212
        %vm1417 = vweird.f32 %v1411
        %vm1418 = vmor %vm1416, %vm1417
        %v1419 = vsel %vm1418, %v1411, %v1415
        %v1420 = vand.u32 2147483647, %v1212
        %vm1421 = vcmp.eq.f32.partialorder %v1420, 8.507059e+37
        %v1422 = vand.u32 %v1212, 2147483648
        %v1423 = vor.u32 1.1754944e-38, %v1422
        %v1424 = vsel %vm1421, %v1423, %v1419
        %v1425 = vrcp.pop %v1214
        %v1426 = vmul.f32 %v1214, %v1425
        %v1427 = vsub.f32 1.0, %v1426
        %v1428 = vmul.f32 %v1425, %v1427
        %v1429 = vadd.f32 %v1425, %v1428
        %vm1430 = vweird.f32 %v1214
        %vm1431 = vweird.f32 %v1425
        %vm1432 = vmor %vm1430, %vm1431
        %v1433 = vsel %vm1432, %v1425, %v1429
        %v1434 = vand.u32 2147483647, %v1214
        %vm1435 = vcmp.eq.f32.partialorder %v1434, 8.507059e+37
        %v1436 = vand.u32 %v1214, 2147483648
        %v1437 = vor.u32 1.1754944e-38, %v1436
        %v1438 = vsel %vm1435, %v1437, %v1433
        %v1439 = vmul.f32 %v1152, %v1228
        %v1440 = vmul.f32 %v1154, %v1242
        %v1441 = vmul.f32 %v1156, %v1256
        %v1442 = vmul.f32 %v1158, %v1270
        %v1443 = vmul.f32 %v1160, %v1284
        %v1444 = vmul.f32 %v1162, %v1298
        %v1445 = vmul.f32 %v1164, %v1312
        %v1446 = vmul.f32 %v1166, %v1326
        %v1447 = vmul.f32 %v1168, %v1340
        %v1448 = vmul.f32 %v1170, %v1354
        %v1449 = vmul.f32 %v1172, %v1368
        %v1450 = vmul.f32 %v1174, %v1382
        %v1451 = vmul.f32 %v1176, %v1396
        %v1452 = vmul.f32 %v1178, %v1410
        %v1453 = vmul.f32 %v1180, %v1424
        %v1454 = vmul.f32 %v1182, %v1438
        %1455 = vst [vmem:[%s430] sm:$0xff] %v1439
        %1456 = vst [vmem:[%s430 + $0x8] sm:$0xff] %v1440
        %1457 = vst [vmem:[%s430 + $0x10] sm:$0xff] %v1441
        %1458 = vst [vmem:[%s430 + $0x18] sm:$0xff] %v1442
        %1459 = vst [vmem:[%s430 + $0x20] sm:$0xff] %v1443
        %1460 = vst [vmem:[%s430 + $0x28] sm:$0xff] %v1444
        %1461 = vst [vmem:[%s430 + $0x30] sm:$0xff] %v1445
        %1462 = vst [vmem:[%s430 + $0x38] sm:$0xff] %v1446
        %1463 = vst [vmem:[%s430 + $0x40] sm:$0xff] %v1447
        %1464 = vst [vmem:[%s430 + $0x48] sm:$0xff] %v1448
        %1465 = vst [vmem:[%s430 + $0x50] sm:$0xff] %v1449
        %1466 = vst [vmem:[%s430 + $0x58] sm:$0xff] %v1450
        %1467 = vst [vmem:[%s430 + $0x60] sm:$0xff] %v1451
        %1468 = vst [vmem:[%s430 + $0x68] sm:$0xff] %v1452
        %1469 = vst [vmem:[%s430 + $0x70] sm:$0xff] %v1453
        %1470 = vst [vmem:[%s430 + $0x78] sm:$0xff] %v1454
        %s1471 = sand.u32 %s213, 1
        %s1472 = scalar_lea.sflag [#allocation4], %s1471
        %s1473 = sand.u32 %s213, 1
        %s1474 = smul.addr %s1473, 128
        %s1475 = scalar_lea.vmem [#allocation11], %s1474
        // Predicated region
        $region73: #{tpu_custom_call.1} parent=51 // pred_check
          %p1476 = pneg %p223
        $region74: #{tpu_custom_call.1} parent=51 // pred_check_branch
          %1478 = sbr.rel (%p1476) target = $region76
        $region75: #{tpu_custom_call.1} parent=51 // pred_region
          %s1479 = smul.u32 16, %s27
          %s1480 = ssub.s32 25, %s1479
          %p1481 = scmp.lt.s32.totalorder %s1480, 16
          %s1482 = scalar_select %p1481, %s1480, 16
          %s1483 = smul.u32 8, %s1482
          %s1484 = ssub.s32 128, %s1483
          %s1485 = sshll.u32 %s1484, 4
          %1486 = vsyncadd %s1472, %s1485
          %p1487 = scmp.ne.s32.totalorder 0, %s1483
          %s1488 = smul.addr %s1479, 8
          %s1489 = scalar_lea.hbm %s8, %s1488
          %s1490 = smul.u32 8, %s1482
          %s1491 = sshll.u32 %s1475, 4
          %s1492 = int_to_ptr.vmem [resolvable:$true] %s1491
          %s1493 = sshll.u32 %s1489, 4
          %s1494 = int_to_ptr.hbm [resolvable:$true] %s1493
          %s1495 = sshll.u32 %s1490, 4
          %1499 = dma.vmem_to_hbm [thread:$0]  (%p1487), %s1492, %s1495, %s1494, %s1472, 128, 128, 8
        $region76: #{tpu_custom_call.1} parent=51 // pred_fallthru
          _
      $region52: #{tpu_custom_call.1} parent=5 // pred_fallthru
        _
      %p1500 = scmp.le.s32.totalorder 2, %s22
      // Predicated region
      $region77: #{tpu_custom_call.1} parent=5 // pred_check
        %p1501 = pneg %p1500
      $region78: #{tpu_custom_call.1} parent=5 // pred_check_branch
        %1503 = sbr.rel (%p1501) target = $region80
      $region79: #{tpu_custom_call.1} parent=5 // pred_region
        %s1504 = ssub.s32 %s22, 2
        // Predicated region
        $region81: #{tpu_custom_call.1} parent=79 // pred_check
          %p1505 = pneg %p229
        $region82: #{tpu_custom_call.1} parent=79 // pred_check_branch
          %1507 = sbr.rel (%p1505) target = $region84
        $region83: #{tpu_custom_call.1} parent=79 // pred_region
          %s1508 = sand.u32 %s214, 1
          %s1509 = scalar_lea.sflag [#allocation4], %s1508
          %s1510 = sand.u32 %s214, 1
          %s1511 = smul.addr %s1510, 128
          %s1512 = scalar_lea.vmem [#allocation11], %s1511
          %1514 = dma.done %s1509, 2048
        $region84: #{tpu_custom_call.1} parent=79 // pred_fallthru
          _
      $region80: #{tpu_custom_call.1} parent=5 // pred_fallthru
        _
    $region6: #{tpu_custom_call.1} parent=1 // loop_footer
      %s26 = sadd.s32 1, %s22
    $region7: #{tpu_custom_call.1} parent=1 // loop_footer_branch
      %21 = sbr.rel target = $region3
    $region8: #{tpu_custom_call.1} parent=1 // loop_exit
      _
    %1515 = vsyncpa [#allocation3], 1
    %s1516 = scalar_lea.sflag [#allocation3], 1
    %1517 = vsyncpa %s1516, 1
    %1518 = vsyncpa [#allocation6], 1
    %1519 = vsyncpa [#allocation9], 1
    %1520 = vsyncpa [#allocation4], 1
    %s1521 = scalar_lea.sflag [#allocation4], 1
    %1522 = vsyncpa %s1521, 1

</llo_original>
